<compile_context>
chip_gen: v7x
topology: tpu7x:2x2x1
jax: 0.10.0
libtpu: 0.0.40
codegen_flags: <defaults>
</compile_context>

<pallas_src>
import numpy as np
import jax
import jax.numpy as jnp
from jax.experimental import pallas as pl
from jax.experimental.pallas import tpu as pltpu

LEAKY_SLOPE = 0.01  # torch.nn.LeakyReLU default


# ----------------------------- Pallas kernel --------------------------------

def _make_decoder_kernel(K, dilations, Q, D, B_BLK, NLAYER, static_base):
    """B_BLK = batch items per grid step; rows per step RB = B_BLK * Q."""
    SW = 2 * D                      # slab width: [qx | qy]
    RB = B_BLK * Q
    # Distinct nonzero tap offsets across all layers (static python ints).
    all_offsets = sorted({k * dil - dil * (K - 1) // 2
                          for dil in set(dilations) for k in range(K)} - {0})

    def kernel(emb_ref, slab_ref, wc_ref, bc_ref, wfe_ref, wfx_ref, bf_ref,
               out_ref):
        slab = slab_ref[...]                                    # (RB, 2D) f32

        # --- emb -> per-row embedding, built once in-kernel (no HBM bcast) ---
        base = 0 if static_base else pl.program_id(0) * B_BLK
        parts = [jnp.broadcast_to(emb_ref[pl.ds(base + b, 1), :], (Q, D))
                 for b in range(B_BLK)]
        emb_rows = parts[0] if B_BLK == 1 else jnp.concatenate(parts, axis=0)
        emb_bf = emb_rows.astype(jnp.bfloat16)                  # (RB, D)

        # --- hoisted validity masks: one per distinct tap offset -------------
        t = jax.lax.broadcasted_iota(jnp.int32, (RB, 1), 0) % Q  # pos in seq
        masks = {
            off: jnp.broadcast_to(
                jnp.logical_and(t + off >= 0, t + off < Q),
                (RB, SW)).astype(jnp.float32)
            for off in all_offsets
        }
        x_lane = jax.lax.broadcasted_iota(jnp.int32, (RB, SW), 1) < D

        def shifted(x, off):
            # y[r] = x[r + off] within the same batch item / sequence, else 0.
            if off == 0:
                return x
            return pltpu.roll(x, (-off) % RB, axis=0) * masks[off]

        def leaky(v):
            return jnp.maximum(v, LEAKY_SLOPE * v)

        def conv(x, w_idx, offs):
            # im2col: K shifted slabs packed along lanes -> ONE bf16 MXU dot
            # against the block-diagonal [convx | convy] weight.
            cols = jnp.concatenate([shifted(x, o) for o in offs], axis=-1)
            return (jnp.dot(cols.astype(jnp.bfloat16), wc_ref[w_idx],
                            preferred_element_type=jnp.float32)
                    + bc_ref[w_idx])                            # bias once

        def conv_block(x, w_idx, dil):
            lp = dil * (K - 1) // 2                             # torch 'same'
            offs = [k * dil - lp for k in range(K)]
            h = leaky(conv(x, w_idx, offs))
            h = leaky(conv(h, w_idx + 1, offs))
            return h + x                                        # residual

        for l in range(NLAYER):
            cs = conv_block(slab, 2 * l, dilations[l])          # [qx_in|qy_in]
            # fc([emb | qx_in | qy_in]) with output packed into the qy lanes
            # (qx output columns of wfe/wfx/bf are zero).
            res2 = (jnp.dot(cs.astype(jnp.bfloat16), wfx_ref[l],
                            preferred_element_type=jnp.float32)
                    + jnp.dot(emb_bf, wfe_ref[l],
                              preferred_element_type=jnp.float32)
                    + bf_ref[l])
            # qx lanes <- qx_in ; qy lanes <- qy_old + res
            slab = jnp.where(x_lane, cs, slab) + res2

        out_ref[...] = slab.astype(out_ref.dtype)

    return kernel


def _resident(shape):
    n = len(shape)
    return pl.BlockSpec(shape, lambda *_: (0,) * n)


def _my_decoder_pallas_impl(emb, qx, qy, w_conv, b_conv, w_fc_emb, w_fc_xy,
                            b_fc, K, dilations, batch_blocks):
    B, Q, D = qy.shape
    SW = 2 * D
    NLAYER = len(dilations)
    assert B % batch_blocks == 0
    B_BLK = B // batch_blocks
    RB = B_BLK * Q

    # Lane-pack the activations once (wrapper-side): [qx | qy] -> (B*Q, 2D).
    slab = jnp.concatenate([qx, qy], axis=-1).reshape(B * Q, SW)

    kernel = _make_decoder_kernel(K, dilations, Q, D, B_BLK, NLAYER,
                                  static_base=(batch_blocks == 1))

    act = pl.BlockSpec((RB, SW), lambda g: (g, 0))

    # Weights are small at this size and kept VMEM-resident across grid steps
    # (constant index_map).
    # TODO(synk): if NLAYER/D grow, turn the layer loop into an "arbitrary"
    #             grid axis with per-layer weight index_maps to bound VMEM.
    out = pl.pallas_call(
        kernel,
        out_shape=jax.ShapeDtypeStruct((B * Q, SW), qy.dtype),
        grid=(batch_blocks,),
        in_specs=[
            _resident(emb.shape),        # emb (B, D), resident, bcast in-kernel
            act,                         # packed activations
            _resident(w_conv.shape),     # (NL*2, K*2D, 2D) bf16 block-diag
            _resident(b_conv.shape),     # (NL*2, 1, 2D)    f32
            _resident(w_fc_emb.shape),   # (NL, D, 2D)      bf16
            _resident(w_fc_xy.shape),    # (NL, 2D, 2D)     bf16
            _resident(b_fc.shape),       # (NL, 1, 2D)      f32
        ],
        out_specs=act,
        compiler_params=pltpu.CompilerParams(
            dimension_semantics=("parallel",)),      # feeds both TCs on v7x
    )(emb, slab, w_conv, b_conv, w_fc_emb, w_fc_xy, b_fc)
    # qy lives in the right D lanes of the slab.
    return out.reshape(B, Q, SW)[:, :, D:]


my_decoder_pallas = jax.jit(
    _my_decoder_pallas_impl,
    static_argnames=("K", "dilations", "batch_blocks"))


def default_batch_blocks(B, Q):
    """Split across v7x's 2 TensorCores only when per-core work is large."""
    try:
        kind = jax.devices()[0].device_kind.lower()
    except Exception:
        kind = ""
    rows_per_core = (B // 2) * Q if B % 2 == 0 else 0
    if "7" in kind and B % 2 == 0 and rows_per_core >= 256 \
            and rows_per_core % 8 == 0:
        return 2
    return 1


# ----------------------------- parameter init -------------------------------

def init_decoder_params(key, D, K, nlayer):
    """Deterministic init. Conv weights as (K, D_in, D_out); fc weight as
    (3D, D) (rows: [emb | qx_in | qy_in]); biases as (1, D)."""
    layers = []
    for i in range(nlayer):
        ks = jax.random.split(jax.random.fold_in(key, i), 10)

        def u(k, shape, fan_in):
            bound = 1.0 / np.sqrt(fan_in)
            return jax.random.uniform(k, shape, jnp.float32, -bound, bound)

        conv_fan = D * K
        w1x = u(ks[0], (K, D, D), conv_fan); b1x = u(ks[1], (1, D), conv_fan)
        w2x = u(ks[2], (K, D, D), conv_fan); b2x = u(ks[3], (1, D), conv_fan)
        w1y = u(ks[4], (K, D, D), conv_fan); b1y = u(ks[5], (1, D), conv_fan)
        w2y = u(ks[6], (K, D, D), conv_fan); b2y = u(ks[7], (1, D), conv_fan)
        wfc = u(ks[8], (3 * D, D), 3 * D);   bfc = u(ks[9], (1, D), 3 * D)
        layers.append((w1x, b1x, w2x, b2x, w1y, b1y, w2y, b2y, wfc, bfc))
    return tuple(layers)


def pack_params(layer_params, K, D):
    """Pack per-layer params for the fused, lane-packed kernel.

    Conv weights become block-diagonal im2col weights acting on the [qx | qy]
    slab; fc weights/bias are zero-padded so their output lands in the qy
    lanes of the slab.  MXU operands are pre-cast to bf16 (biases stay f32).
    """
    SW = 2 * D
    wc, bc, wfe, wfx, bf = [], [], [], [], []
    for (w1x, b1x, w2x, b2x, w1y, b1y, w2y, b2y, wfc, bfc) in layer_params:
        def blockdiag(wx, wy):
            w = jnp.zeros((K, SW, SW), jnp.float32)
            w = w.at[:, :D, :D].set(wx).at[:, D:, D:].set(wy)
            return w.reshape(K * SW, SW)

        wc += [blockdiag(w1x, w1y), blockdiag(w2x, w2y)]
        bc += [jnp.concatenate([b1x, b1y], axis=-1),
               jnp.concatenate([b2x, b2y], axis=-1)]
        wfe.append(jnp.zeros((D, SW), jnp.float32).at[:, D:].set(wfc[:D]))
        wfx.append(jnp.zeros((SW, SW), jnp.float32).at[:, D:].set(wfc[D:]))
        bf.append(jnp.zeros((1, SW), jnp.float32).at[:, D:].set(bfc))
    return (jnp.stack(wc).astype(jnp.bfloat16),   # (NL*2, K*2D, 2D)
            jnp.stack(bc),                        # (NL*2, 1, 2D) f32
            jnp.stack(wfe).astype(jnp.bfloat16),  # (NL, D, 2D)
            jnp.stack(wfx).astype(jnp.bfloat16),  # (NL, 2D, 2D)
            jnp.stack(bf))                        # (NL, 1, 2D)  f32


# ----------------------------- pure-JAX reference ---------------------------

def _conv1d_ref(x, w, b, dilation):
    # x: (B, Q, D); w: (K, Din, Dout); b: (1, D). PyTorch padding='same'.
    K = w.shape[0]
    total = dilation * (K - 1)
    left = total // 2
    right = total - left
    xp = jnp.pad(x, ((0, 0), (left, right), (0, 0)))
    Q = x.shape[1]
    acc = jnp.zeros(x.shape[:2] + (w.shape[2],), jnp.float32) + b.reshape(1, 1, -1)
    for k in range(K):
        acc = acc + jnp.einsum('bqd,de->bqe',
                               xp[:, k * dilation:k * dilation + Q, :], w[k])
    return acc


def _leaky_ref(x):
    return jnp.where(x > 0, x, LEAKY_SLOPE * x)


def decoder_ref(emb, qx, qy, layer_params, dilations):
    for params, dil in zip(layer_params, dilations):
        w1x, b1x, w2x, b2x, w1y, b1y, w2y, b2y, wfc, bfc = params

        def block(x, w1, b1, w2, b2):
            h = _leaky_ref(_conv1d_ref(x, w1, b1, dil))
            h = _leaky_ref(_conv1d_ref(h, w2, b2, dil))
            return h + x

        qx_in = block(qx, w1x, b1x, w2x, b2x)
        qy_in = block(qy, w1y, b1y, w2y, b2y)
        B, Q, D = qy.shape
        emb_in = jnp.broadcast_to(emb[:, None, :], (B, Q, D))
        cat = jnp.concatenate([emb_in, qx_in, qy_in], axis=-1)
        res = cat @ wfc + bfc.reshape(1, 1, -1)
        qy = res + qy
        qx = qx_in
    return qy


# --------------------------------- main --------------------------------------

if __name__ == "__main__":
    B, Q, D = 2, 16, 32        # batch, sequence length, d_model
    K, NLAYER = 3, 2           # kernel_size, nlayer
    DILATION_FLAG = False      # MyDecoder(..., dilation=False) default
    dilations = tuple(2 ** i if DILATION_FLAG else 1 for i in range(NLAYER))

    key = jax.random.PRNGKey(0)
    k_emb, k_qx, k_qy, k_par = jax.random.split(key, 4)
    emb = jax.random.normal(k_emb, (B, D), jnp.float32)
    query_x = jax.random.normal(k_qx, (B, Q, D), jnp.float32)
    query_y = jax.random.normal(k_qy, (B, Q, D), jnp.float32)

    layer_params = init_decoder_params(k_par, D, K, NLAYER)
    w_conv, b_conv, w_fc_emb, w_fc_xy, b_fc = pack_params(layer_params, K, D)

    bb = default_batch_blocks(B, Q)
    out = my_decoder_pallas(emb, query_x, query_y,
                            w_conv, b_conv, w_fc_emb, w_fc_xy, b_fc,
                            K=K, dilations=dilations, batch_blocks=bb)
    out = jax.block_until_ready(out)

    ref = decoder_ref(emb, query_x, query_y, layer_params, dilations)
    assert out.shape == (B, Q, D)
    # bf16 MXU operands (same MXU path XLA's default-precision f32 matmuls
    # take); tolerance sized for bf16 accumulation over NLAYER layers.
    assert jnp.allclose(out, ref, rtol=2e-2, atol=2e-2), "mismatch vs JAX reference"
    print("KERNEL_OK")
</pallas_src>

<mosaic_0001>
module attributes {stable_mosaic.version = 11 : i64} {
  func.func @kernel(%arg0: i32, %arg1: memref<2x32xf32, #tpu.memory_space<vmem>>, %arg2: memref<32x64xf32, #tpu.memory_space<vmem>>, %arg3: memref<4x192x64xbf16, #tpu.memory_space<vmem>>, %arg4: memref<4x1x64xf32, #tpu.memory_space<vmem>>, %arg5: memref<2x32x64xbf16, #tpu.memory_space<vmem>>, %arg6: memref<2x64x64xbf16, #tpu.memory_space<vmem>>, %arg7: memref<2x1x64xf32, #tpu.memory_space<vmem>>, %arg8: memref<32x64xf32, #tpu.memory_space<vmem>>) attributes {dimension_semantics = [#tpu.dimension_semantics<parallel>], iteration_bounds = array<i64: 1>, scalar_prefetch = 0 : i64, scratch_operands = 0 : i64, tpu.core_type = #tpu.core_type<tc>, window_params = [{pipeline_mode = #tpu.pipeline_mode<synchronous>, transform_indices = @transform_0, window_bounds = array<i64: 2, 32>}, {transform_indices = @transform_1, window_bounds = array<i64: 32, 64>}, {pipeline_mode = #tpu.pipeline_mode<synchronous>, transform_indices = @transform_2, window_bounds = array<i64: 4, 192, 64>}, {pipeline_mode = #tpu.pipeline_mode<synchronous>, transform_indices = @transform_3, window_bounds = array<i64: 4, 1, 64>}, {pipeline_mode = #tpu.pipeline_mode<synchronous>, transform_indices = @transform_4, window_bounds = array<i64: 2, 32, 64>}, {pipeline_mode = #tpu.pipeline_mode<synchronous>, transform_indices = @transform_5, window_bounds = array<i64: 2, 64, 64>}, {pipeline_mode = #tpu.pipeline_mode<synchronous>, transform_indices = @transform_6, window_bounds = array<i64: 2, 1, 64>}, {transform_indices = @transform_7, window_bounds = array<i64: 32, 64>}]} {
    %c0 = arith.constant 0 : index
    %c0_0 = arith.constant 0 : index
    %0 = vector.load %arg2[%c0, %c0_0] : memref<32x64xf32, #tpu.memory_space<vmem>>, vector<32x64xf32>
    %c0_1 = arith.constant 0 : index
    %c0_2 = arith.constant 0 : index
    %1 = vector.load %arg1[%c0_1, %c0_2] : memref<2x32xf32, #tpu.memory_space<vmem>>, vector<1x32xf32>
    %2 = vector.shape_cast %1 : vector<1x32xf32> to vector<1x32xf32>
    %3 = vector.broadcast %2 : vector<1x32xf32> to vector<16x32xf32>
    %c1 = arith.constant 1 : index
    %c0_3 = arith.constant 0 : index
    %4 = vector.load %arg1[%c1, %c0_3] : memref<2x32xf32, #tpu.memory_space<vmem>>, vector<1x32xf32>
    %5 = vector.shape_cast %4 : vector<1x32xf32> to vector<1x32xf32>
    %6 = vector.broadcast %5 : vector<1x32xf32> to vector<16x32xf32>
    %7 = tpu.concatenate %3, %6 in 0 : vector<16x32xf32>, vector<16x32xf32> -> vector<32x32xf32>
    %8 = arith.truncf %7 : vector<32x32xf32> to vector<32x32xbf16>
    %9 = tpu.iota {dimensions = array<i32: 0>} : vector<32x1xi32>
    %c16_i32 = arith.constant 16 : i32
    %c0_i32 = arith.constant 0 : i32
    %10 = arith.cmpi eq, %c16_i32, %c0_i32 : i32
    %c1_i32 = arith.constant 1 : i32
    %11 = arith.select %10, %c1_i32, %c16_i32 : i32
    %12 = vector.broadcast %11 : i32 to vector<32x1xi32>
    %13 = arith.remsi %9, %12 : vector<32x1xi32>
    %c0_i32_4 = arith.constant 0 : i32
    %14 = vector.broadcast %c0_i32_4 : i32 to vector<32x1xi32>
    %15 = arith.cmpi ne, %13, %14 : vector<32x1xi32>
    %c0_i32_5 = arith.constant 0 : i32
    %16 = vector.broadcast %c0_i32_5 : i32 to vector<32x1xi32>
    %17 = arith.cmpi slt, %13, %16 : vector<32x1xi32>
    %c0_i32_6 = arith.constant 0 : i32
    %18 = arith.cmpi slt, %11, %c0_i32_6 : i32
    %19 = vector.broadcast %18 : i1 to vector<32x1xi1>
    %20 = vector.broadcast %19 : vector<32x1xi1> to vector<32x1xi1>
    %21 = arith.xori %17, %20 : vector<32x1xi1>
    %22 = arith.andi %21, %15 : vector<32x1xi1>
    %23 = vector.broadcast %11 : i32 to vector<32x1xi32>
    %24 = arith.addi %13, %23 : vector<32x1xi32>
    %25 = arith.select %22, %24, %13 : vector<32x1xi1>, vector<32x1xi32>
    %c-1_i32 = arith.constant -1 : i32
    %26 = vector.broadcast %c-1_i32 : i32 to vector<32x1xi32>
    %27 = arith.addi %25, %26 : vector<32x1xi32>
    %c0_i32_7 = arith.constant 0 : i32
    %28 = vector.broadcast %c0_i32_7 : i32 to vector<32x1xi32>
    %29 = arith.cmpi sge, %27, %28 : vector<32x1xi32>
    %c-1_i32_8 = arith.constant -1 : i32
    %30 = vector.broadcast %c-1_i32_8 : i32 to vector<32x1xi32>
    %31 = arith.addi %25, %30 : vector<32x1xi32>
    %c16_i32_9 = arith.constant 16 : i32
    %32 = vector.broadcast %c16_i32_9 : i32 to vector<32x1xi32>
    %33 = arith.cmpi slt, %31, %32 : vector<32x1xi32>
    %34 = arith.andi %29, %33 : vector<32x1xi1>
    %35 = vector.shape_cast %34 : vector<32x1xi1> to vector<32x1xi1>
    %36 = vector.broadcast %35 : vector<32x1xi1> to vector<32x64xi1>
    %37 = arith.extui %36 : vector<32x64xi1> to vector<32x64xi32>
    %38 = arith.sitofp %37 : vector<32x64xi32> to vector<32x64xf32>
    %c1_i32_10 = arith.constant 1 : i32
    %39 = vector.broadcast %c1_i32_10 : i32 to vector<32x1xi32>
    %40 = arith.addi %25, %39 : vector<32x1xi32>
    %c0_i32_11 = arith.constant 0 : i32
    %41 = vector.broadcast %c0_i32_11 : i32 to vector<32x1xi32>
    %42 = arith.cmpi sge, %40, %41 : vector<32x1xi32>
    %c1_i32_12 = arith.constant 1 : i32
    %43 = vector.broadcast %c1_i32_12 : i32 to vector<32x1xi32>
    %44 = arith.addi %25, %43 : vector<32x1xi32>
    %c16_i32_13 = arith.constant 16 : i32
    %45 = vector.broadcast %c16_i32_13 : i32 to vector<32x1xi32>
    %46 = arith.cmpi slt, %44, %45 : vector<32x1xi32>
    %47 = arith.andi %42, %46 : vector<32x1xi1>
    %48 = vector.shape_cast %47 : vector<32x1xi1> to vector<32x1xi1>
    %49 = vector.broadcast %48 : vector<32x1xi1> to vector<32x64xi1>
    %50 = arith.extui %49 : vector<32x64xi1> to vector<32x64xi32>
    %51 = arith.sitofp %50 : vector<32x64xi32> to vector<32x64xf32>
    %52 = tpu.iota {dimensions = array<i32: 1>} : vector<32x64xi32>
    %c32_i32 = arith.constant 32 : i32
    %53 = vector.broadcast %c32_i32 : i32 to vector<32x64xi32>
    %54 = arith.cmpi slt, %52, %53 : vector<32x64xi32>
    %c1_i32_14 = arith.constant 1 : i32
    %55 = tpu.dynamic_rotate %0 by %c1_i32_14 dim 0 : vector<32x64xf32>, i32 -> vector<32x64xf32>
    %56 = arith.mulf %55, %38 : vector<32x64xf32>
    %c31_i32 = arith.constant 31 : i32
    %57 = tpu.dynamic_rotate %0 by %c31_i32 dim 0 : vector<32x64xf32>, i32 -> vector<32x64xf32>
    %58 = arith.mulf %57, %51 : vector<32x64xf32>
    %59 = tpu.concatenate %56, %0, %58 in 1 : vector<32x64xf32>, vector<32x64xf32>, vector<32x64xf32> -> vector<32x192xf32>
    %60 = arith.truncf %59 : vector<32x192xf32> to vector<32x192xbf16>
    %c0_15 = arith.constant 0 : index
    %c0_16 = arith.constant 0 : index
    %c0_17 = arith.constant 0 : index
    %61 = vector.load %arg3[%c0_15, %c0_16, %c0_17] : memref<4x192x64xbf16, #tpu.memory_space<vmem>>, vector<1x192x64xbf16>
    %62 = vector.shape_cast %61 : vector<1x192x64xbf16> to vector<192x64xbf16>
    %cst = arith.constant dense<0.000000e+00> : vector<32x64xf32>
    %63 = tpu.matmul %60, %62, %cst {dimension_numbers = #tpu.dot_dimension_numbers<[1], [0], [0], [1], [0, 0, 1, 1], [], []>} : vector<32x192xbf16>, vector<192x64xbf16>, vector<32x64xf32> -> vector<32x64xf32>
    %c0_18 = arith.constant 0 : index
    %c0_19 = arith.constant 0 : index
    %c0_20 = arith.constant 0 : index
    %64 = vector.load %arg4[%c0_18, %c0_19, %c0_20] : memref<4x1x64xf32, #tpu.memory_space<vmem>>, vector<1x1x64xf32>
    %65 = vector.shape_cast %64 : vector<1x1x64xf32> to vector<1x64xf32>
    %66 = vector.broadcast %65 : vector<1x64xf32> to vector<32x64xf32>
    %67 = arith.addf %63, %66 : vector<32x64xf32>
    %cst_21 = arith.constant 0.00999999977 : f32
    %68 = vector.broadcast %cst_21 : f32 to vector<32x64xf32>
    %69 = arith.mulf %68, %67 : vector<32x64xf32>
    %70 = arith.maximumf %67, %69 : vector<32x64xf32>
    %c1_i32_22 = arith.constant 1 : i32
    %71 = tpu.dynamic_rotate %70 by %c1_i32_22 dim 0 : vector<32x64xf32>, i32 -> vector<32x64xf32>
    %72 = arith.mulf %71, %38 : vector<32x64xf32>
    %c31_i32_23 = arith.constant 31 : i32
    %73 = tpu.dynamic_rotate %70 by %c31_i32_23 dim 0 : vector<32x64xf32>, i32 -> vector<32x64xf32>
    %74 = arith.mulf %73, %51 : vector<32x64xf32>
    %75 = tpu.concatenate %72, %70, %74 in 1 : vector<32x64xf32>, vector<32x64xf32>, vector<32x64xf32> -> vector<32x192xf32>
    %76 = arith.truncf %75 : vector<32x192xf32> to vector<32x192xbf16>
    %c1_24 = arith.constant 1 : index
    %c0_25 = arith.constant 0 : index
    %c0_26 = arith.constant 0 : index
    %77 = vector.load %arg3[%c1_24, %c0_25, %c0_26] : memref<4x192x64xbf16, #tpu.memory_space<vmem>>, vector<1x192x64xbf16>
    %78 = vector.shape_cast %77 : vector<1x192x64xbf16> to vector<192x64xbf16>
    %cst_27 = arith.constant dense<0.000000e+00> : vector<32x64xf32>
    %79 = tpu.matmul %76, %78, %cst_27 {dimension_numbers = #tpu.dot_dimension_numbers<[1], [0], [0], [1], [0, 0, 1, 1], [], []>} : vector<32x192xbf16>, vector<192x64xbf16>, vector<32x64xf32> -> vector<32x64xf32>
    %c1_28 = arith.constant 1 : index
    %c0_29 = arith.constant 0 : index
    %c0_30 = arith.constant 0 : index
    %80 = vector.load %arg4[%c1_28, %c0_29, %c0_30] : memref<4x1x64xf32, #tpu.memory_space<vmem>>, vector<1x1x64xf32>
    %81 = vector.shape_cast %80 : vector<1x1x64xf32> to vector<1x64xf32>
    %82 = vector.broadcast %81 : vector<1x64xf32> to vector<32x64xf32>
    %83 = arith.addf %79, %82 : vector<32x64xf32>
    %cst_31 = arith.constant 0.00999999977 : f32
    %84 = vector.broadcast %cst_31 : f32 to vector<32x64xf32>
    %85 = arith.mulf %84, %83 : vector<32x64xf32>
    %86 = arith.maximumf %83, %85 : vector<32x64xf32>
    %87 = arith.addf %86, %0 : vector<32x64xf32>
    %88 = arith.truncf %87 : vector<32x64xf32> to vector<32x64xbf16>
    %c0_32 = arith.constant 0 : index
    %c0_33 = arith.constant 0 : index
    %c0_34 = arith.constant 0 : index
    %89 = vector.load %arg6[%c0_32, %c0_33, %c0_34] : memref<2x64x64xbf16, #tpu.memory_space<vmem>>, vector<1x64x64xbf16>
    %90 = vector.shape_cast %89 : vector<1x64x64xbf16> to vector<64x64xbf16>
    %cst_35 = arith.constant dense<0.000000e+00> : vector<32x64xf32>
    %91 = tpu.matmul %88, %90, %cst_35 {dimension_numbers = #tpu.dot_dimension_numbers<[1], [0], [0], [1], [0, 0, 1, 1], [], []>} : vector<32x64xbf16>, vector<64x64xbf16>, vector<32x64xf32> -> vector<32x64xf32>
    %c0_36 = arith.constant 0 : index
    %c0_37 = arith.constant 0 : index
    %c0_38 = arith.constant 0 : index
    %92 = vector.load %arg5[%c0_36, %c0_37, %c0_38] : memref<2x32x64xbf16, #tpu.memory_space<vmem>>, vector<1x32x64xbf16>
    %93 = vector.shape_cast %92 : vector<1x32x64xbf16> to vector<32x64xbf16>
    %cst_39 = arith.constant dense<0.000000e+00> : vector<32x64xf32>
    %94 = tpu.matmul %8, %93, %cst_39 {dimension_numbers = #tpu.dot_dimension_numbers<[1], [0], [0], [1], [0, 0, 1, 1], [], []>} : vector<32x32xbf16>, vector<32x64xbf16>, vector<32x64xf32> -> vector<32x64xf32>
    %95 = arith.addf %91, %94 : vector<32x64xf32>
    %c0_40 = arith.constant 0 : index
    %c0_41 = arith.constant 0 : index
    %c0_42 = arith.constant 0 : index
    %96 = vector.load %arg7[%c0_40, %c0_41, %c0_42] : memref<2x1x64xf32, #tpu.memory_space<vmem>>, vector<1x1x64xf32>
    %97 = vector.shape_cast %96 : vector<1x1x64xf32> to vector<1x64xf32>
    %98 = vector.broadcast %97 : vector<1x64xf32> to vector<32x64xf32>
    %99 = arith.addf %95, %98 : vector<32x64xf32>
    %100 = arith.select %54, %87, %0 : vector<32x64xi1>, vector<32x64xf32>
    %101 = arith.addf %100, %99 : vector<32x64xf32>
    %c1_i32_43 = arith.constant 1 : i32
    %102 = tpu.dynamic_rotate %101 by %c1_i32_43 dim 0 : vector<32x64xf32>, i32 -> vector<32x64xf32>
    %103 = arith.mulf %102, %38 : vector<32x64xf32>
    %c31_i32_44 = arith.constant 31 : i32
    %104 = tpu.dynamic_rotate %101 by %c31_i32_44 dim 0 : vector<32x64xf32>, i32 -> vector<32x64xf32>
    %105 = arith.mulf %104, %51 : vector<32x64xf32>
    %106 = tpu.concatenate %103, %101, %105 in 1 : vector<32x64xf32>, vector<32x64xf32>, vector<32x64xf32> -> vector<32x192xf32>
    %107 = arith.truncf %106 : vector<32x192xf32> to vector<32x192xbf16>
    %c2 = arith.constant 2 : index
    %c0_45 = arith.constant 0 : index
    %c0_46 = arith.constant 0 : index
    %108 = vector.load %arg3[%c2, %c0_45, %c0_46] : memref<4x192x64xbf16, #tpu.memory_space<vmem>>, vector<1x192x64xbf16>
    %109 = vector.shape_cast %108 : vector<1x192x64xbf16> to vector<192x64xbf16>
    %cst_47 = arith.constant dense<0.000000e+00> : vector<32x64xf32>
    %110 = tpu.matmul %107, %109, %cst_47 {dimension_numbers = #tpu.dot_dimension_numbers<[1], [0], [0], [1], [0, 0, 1, 1], [], []>} : vector<32x192xbf16>, vector<192x64xbf16>, vector<32x64xf32> -> vector<32x64xf32>
    %c2_48 = arith.constant 2 : index
    %c0_49 = arith.constant 0 : index
    %c0_50 = arith.constant 0 : index
    %111 = vector.load %arg4[%c2_48, %c0_49, %c0_50] : memref<4x1x64xf32, #tpu.memory_space<vmem>>, vector<1x1x64xf32>
    %112 = vector.shape_cast %111 : vector<1x1x64xf32> to vector<1x64xf32>
    %113 = vector.broadcast %112 : vector<1x64xf32> to vector<32x64xf32>
    %114 = arith.addf %110, %113 : vector<32x64xf32>
    %cst_51 = arith.constant 0.00999999977 : f32
    %115 = vector.broadcast %cst_51 : f32 to vector<32x64xf32>
    %116 = arith.mulf %115, %114 : vector<32x64xf32>
    %117 = arith.maximumf %114, %116 : vector<32x64xf32>
    %c1_i32_52 = arith.constant 1 : i32
    %118 = tpu.dynamic_rotate %117 by %c1_i32_52 dim 0 : vector<32x64xf32>, i32 -> vector<32x64xf32>
    %119 = arith.mulf %118, %38 : vector<32x64xf32>
    %c31_i32_53 = arith.constant 31 : i32
    %120 = tpu.dynamic_rotate %117 by %c31_i32_53 dim 0 : vector<32x64xf32>, i32 -> vector<32x64xf32>
    %121 = arith.mulf %120, %51 : vector<32x64xf32>
    %122 = tpu.concatenate %119, %117, %121 in 1 : vector<32x64xf32>, vector<32x64xf32>, vector<32x64xf32> -> vector<32x192xf32>
    %123 = arith.truncf %122 : vector<32x192xf32> to vector<32x192xbf16>
    %c3 = arith.constant 3 : index
    %c0_54 = arith.constant 0 : index
    %c0_55 = arith.constant 0 : index
    %124 = vector.load %arg3[%c3, %c0_54, %c0_55] : memref<4x192x64xbf16, #tpu.memory_space<vmem>>, vector<1x192x64xbf16>
    %125 = vector.shape_cast %124 : vector<1x192x64xbf16> to vector<192x64xbf16>
    %cst_56 = arith.constant dense<0.000000e+00> : vector<32x64xf32>
    %126 = tpu.matmul %123, %125, %cst_56 {dimension_numbers = #tpu.dot_dimension_numbers<[1], [0], [0], [1], [0, 0, 1, 1], [], []>} : vector<32x192xbf16>, vector<192x64xbf16>, vector<32x64xf32> -> vector<32x64xf32>
    %c3_57 = arith.constant 3 : index
    %c0_58 = arith.constant 0 : index
    %c0_59 = arith.constant 0 : index
    %127 = vector.load %arg4[%c3_57, %c0_58, %c0_59] : memref<4x1x64xf32, #tpu.memory_space<vmem>>, vector<1x1x64xf32>
    %128 = vector.shape_cast %127 : vector<1x1x64xf32> to vector<1x64xf32>
    %129 = vector.broadcast %128 : vector<1x64xf32> to vector<32x64xf32>
    %130 = arith.addf %126, %129 : vector<32x64xf32>
    %cst_60 = arith.constant 0.00999999977 : f32
    %131 = vector.broadcast %cst_60 : f32 to vector<32x64xf32>
    %132 = arith.mulf %131, %130 : vector<32x64xf32>
    %133 = arith.maximumf %130, %132 : vector<32x64xf32>
    %134 = arith.addf %133, %101 : vector<32x64xf32>
    %135 = arith.truncf %134 : vector<32x64xf32> to vector<32x64xbf16>
    %c1_61 = arith.constant 1 : index
    %c0_62 = arith.constant 0 : index
    %c0_63 = arith.constant 0 : index
    %136 = vector.load %arg6[%c1_61, %c0_62, %c0_63] : memref<2x64x64xbf16, #tpu.memory_space<vmem>>, vector<1x64x64xbf16>
    %137 = vector.shape_cast %136 : vector<1x64x64xbf16> to vector<64x64xbf16>
    %cst_64 = arith.constant dense<0.000000e+00> : vector<32x64xf32>
    %138 = tpu.matmul %135, %137, %cst_64 {dimension_numbers = #tpu.dot_dimension_numbers<[1], [0], [0], [1], [0, 0, 1, 1], [], []>} : vector<32x64xbf16>, vector<64x64xbf16>, vector<32x64xf32> -> vector<32x64xf32>
    %c1_65 = arith.constant 1 : index
    %c0_66 = arith.constant 0 : index
    %c0_67 = arith.constant 0 : index
    %139 = vector.load %arg5[%c1_65, %c0_66, %c0_67] : memref<2x32x64xbf16, #tpu.memory_space<vmem>>, vector<1x32x64xbf16>
    %140 = vector.shape_cast %139 : vector<1x32x64xbf16> to vector<32x64xbf16>
    %cst_68 = arith.constant dense<0.000000e+00> : vector<32x64xf32>
    %141 = tpu.matmul %8, %140, %cst_68 {dimension_numbers = #tpu.dot_dimension_numbers<[1], [0], [0], [1], [0, 0, 1, 1], [], []>} : vector<32x32xbf16>, vector<32x64xbf16>, vector<32x64xf32> -> vector<32x64xf32>
    %142 = arith.addf %138, %141 : vector<32x64xf32>
    %c1_69 = arith.constant 1 : index
    %c0_70 = arith.constant 0 : index
    %c0_71 = arith.constant 0 : index
    %143 = vector.load %arg7[%c1_69, %c0_70, %c0_71] : memref<2x1x64xf32, #tpu.memory_space<vmem>>, vector<1x1x64xf32>
    %144 = vector.shape_cast %143 : vector<1x1x64xf32> to vector<1x64xf32>
    %145 = vector.broadcast %144 : vector<1x64xf32> to vector<32x64xf32>
    %146 = arith.addf %142, %145 : vector<32x64xf32>
    %147 = arith.select %54, %134, %101 : vector<32x64xi1>, vector<32x64xf32>
    %148 = arith.addf %147, %146 : vector<32x64xf32>
    %c0_72 = arith.constant 0 : index
    %c0_73 = arith.constant 0 : index
    %149 = vector.load %arg8[%c0_72, %c0_73] : memref<32x64xf32, #tpu.memory_space<vmem>>, vector<32x64xf32>
    tpu.vector_store %arg8[%c0_72, %c0_73], %148 {strides = array<i32>} : memref<32x64xf32, #tpu.memory_space<vmem>>, vector<32x64xf32>,
    return
  }
  func.func @transform_0(%arg0: i32) -> (i32, i32) {
    %c0_i32 = arith.constant 0 : i32
    %c0_i32_0 = arith.constant 0 : i32
    %c0_i32_1 = arith.constant 0 : i32
    return %c0_i32, %c0_i32_0 : i32, i32
  }
  func.func @transform_1(%arg0: i32) -> (i32, i32) {
    %c0_i32 = arith.constant 0 : i32
    %c0_i32_0 = arith.constant 0 : i32
    return %arg0, %c0_i32 : i32, i32
  }
  func.func @transform_2(%arg0: i32) -> (i32, i32, i32) {
    %c0_i32 = arith.constant 0 : i32
    %c0_i32_0 = arith.constant 0 : i32
    %c0_i32_1 = arith.constant 0 : i32
    %c0_i32_2 = arith.constant 0 : i32
    return %c0_i32, %c0_i32_0, %c0_i32_1 : i32, i32, i32
  }
  func.func @transform_3(%arg0: i32) -> (i32, i32, i32) {
    %c0_i32 = arith.constant 0 : i32
    %c0_i32_0 = arith.constant 0 : i32
    %c0_i32_1 = arith.constant 0 : i32
    %c0_i32_2 = arith.constant 0 : i32
    return %c0_i32, %c0_i32_0, %c0_i32_1 : i32, i32, i32
  }
  func.func @transform_4(%arg0: i32) -> (i32, i32, i32) {
    %c0_i32 = arith.constant 0 : i32
    %c0_i32_0 = arith.constant 0 : i32
    %c0_i32_1 = arith.constant 0 : i32
    %c0_i32_2 = arith.constant 0 : i32
    return %c0_i32, %c0_i32_0, %c0_i32_1 : i32, i32, i32
  }
  func.func @transform_5(%arg0: i32) -> (i32, i32, i32) {
    %c0_i32 = arith.constant 0 : i32
    %c0_i32_0 = arith.constant 0 : i32
    %c0_i32_1 = arith.constant 0 : i32
    %c0_i32_2 = arith.constant 0 : i32
    return %c0_i32, %c0_i32_0, %c0_i32_1 : i32, i32, i32
  }
  func.func @transform_6(%arg0: i32) -> (i32, i32, i32) {
    %c0_i32 = arith.constant 0 : i32
    %c0_i32_0 = arith.constant 0 : i32
    %c0_i32_1 = arith.constant 0 : i32
    %c0_i32_2 = arith.constant 0 : i32
    return %c0_i32, %c0_i32_0, %c0_i32_1 : i32, i32, i32
  }
  func.func @transform_7(%arg0: i32) -> (i32, i32) {
    %c0_i32 = arith.constant 0 : i32
    %c0_i32_0 = arith.constant 0 : i32
    return %arg0, %c0_i32 : i32, i32
  }
}

</mosaic_0001>

<llo_original>
// kernel: _my_decoder_pallas_impl.1
$region0: #{_my_decoder_pallas_impl.1}
  #allocation0 [shape = 'u32[]', space=smem, size = 0x4, offset = 0x4, fixed_abs, tag = 'smem constant byte address 0x4 - core index']
  #allocation1 [shape = 'u32[144,128]{1,0:T(1,128)}', space=vmem, size = 0x12000, scoped, tag = 'internal scratch']
  %s0 = inlined_call_operand.vmem [shape: f32[2,32], index: 0, kind: input, shape index: {}]
  %s1 = inlined_call_operand.vmem [shape: f32[32,64], index: 1, kind: input, shape index: {}]
  %s2 = inlined_call_operand.vmem [shape: bf16[4,192,64], index: 2, kind: input, shape index: {}]
  %s3 = inlined_call_operand.vmem [shape: f32[4,1,64], index: 3, kind: input, shape index: {}]
  %s4 = inlined_call_operand.vmem [shape: bf16[2,32,64], index: 4, kind: input, shape index: {}]
  %s5 = inlined_call_operand.vmem [shape: bf16[2,64,64], index: 5, kind: input, shape index: {}]
  %s6 = inlined_call_operand.vmem [shape: f32[2,1,64], index: 6, kind: input, shape index: {}]
  %s7 = inlined_call_operand.vmem [shape: f32[32,64], index: 7, kind: output, shape index: {}]
  %s8 = sld [smem:[#allocation0]]
  $region38: #{_my_decoder_pallas_impl.1} parent=0
    _
  %s10 = ssub.s32 1, %s8
  %s11 = scalar_select 0, %s10, %s8
  // Predicated region
  $region2: #{_my_decoder_pallas_impl.1} parent=0 // pred_check
    _
  $region3: #{_my_decoder_pallas_impl.1} parent=0 // pred_check_branch
    %13 = sbr.rel (0) target = $region5
  $region4: #{_my_decoder_pallas_impl.1} parent=0 // pred_region
    _
  $region5: #{_my_decoder_pallas_impl.1} parent=0 // pred_fallthru
    _
  // Predicated region
  $region6: #{_my_decoder_pallas_impl.1} parent=0 // pred_check
    _
  $region7: #{_my_decoder_pallas_impl.1} parent=0 // pred_check_branch
    %15 = sbr.rel (0) target = $region9
  $region8: #{_my_decoder_pallas_impl.1} parent=0 // pred_region
    _
  $region9: #{_my_decoder_pallas_impl.1} parent=0 // pred_fallthru
    _
  // Predicated region
  $region10: #{_my_decoder_pallas_impl.1} parent=0 // pred_check
    _
  $region11: #{_my_decoder_pallas_impl.1} parent=0 // pred_check_branch
    %17 = sbr.rel (0) target = $region13
  $region12: #{_my_decoder_pallas_impl.1} parent=0 // pred_region
    _
  $region13: #{_my_decoder_pallas_impl.1} parent=0 // pred_fallthru
    _
  // Predicated region
  $region14: #{_my_decoder_pallas_impl.1} parent=0 // pred_check
    _
  $region15: #{_my_decoder_pallas_impl.1} parent=0 // pred_check_branch
    %19 = sbr.rel (0) target = $region17
  $region16: #{_my_decoder_pallas_impl.1} parent=0 // pred_region
    _
  $region17: #{_my_decoder_pallas_impl.1} parent=0 // pred_fallthru
    _
  // Predicated region
  $region18: #{_my_decoder_pallas_impl.1} parent=0 // pred_check
    _
  $region19: #{_my_decoder_pallas_impl.1} parent=0 // pred_check_branch
    %21 = sbr.rel (0) target = $region21
  $region20: #{_my_decoder_pallas_impl.1} parent=0 // pred_region
    _
  $region21: #{_my_decoder_pallas_impl.1} parent=0 // pred_fallthru
    _
  // Predicated region
  $region22: #{_my_decoder_pallas_impl.1} parent=0 // pred_check
    _
  $region23: #{_my_decoder_pallas_impl.1} parent=0 // pred_check_branch
    %23 = sbr.rel (0) target = $region25
  $region24: #{_my_decoder_pallas_impl.1} parent=0 // pred_region
    _
  $region25: #{_my_decoder_pallas_impl.1} parent=0 // pred_fallthru
    _
  // Predicated region
  $region26: #{_my_decoder_pallas_impl.1} parent=0 // pred_check
    _
  $region27: #{_my_decoder_pallas_impl.1} parent=0 // pred_check_branch
    %25 = sbr.rel (0) target = $region29
  $region28: #{_my_decoder_pallas_impl.1} parent=0 // pred_region
    _
  $region29: #{_my_decoder_pallas_impl.1} parent=0 // pred_fallthru
    _
  %v27 = vld [vmem:[%s1] sm:$0xff]
  %v28 = vld [vmem:[%s1 + $0x8] sm:$0xff]
  %v29 = vld [vmem:[%s1 + $0x10] sm:$0xff]
  %v30 = vld [vmem:[%s1 + $0x18] sm:$0xff]
  %v31 = vld [vmem:[%s0] sm:$0x1]
  %v32 = vlaneseq
  %v33 = vshrl.u32 %v32, 7
  %v34 = vsub.s32 0, %v33
  %v35 = vrot.slane %v31, %v34
  %v36 = vld [vmem:[%s0 + $0x1] sm:$0x1]
  %v37 = vlaneseq
  %v38 = vshrl.u32 %v37, 7
  %v39 = vsub.s32 0, %v38
  %v40 = vrot.slane %v36, %v39
  %v41 = vpack.c.bf16 %v35, %v35
  %v42 = vpack.c.bf16 %v40, %v40
  %v43 = vlaneseq
  %v44 = vshrl.u32 %v43, 7
  %v45 = vadd.s32 %v44, 8
  %v46 = vadd.s32 %v44, 16
  %v47 = vadd.s32 %v44, 24
  %vm48 = vcmp.lt.s32.totalorder %v44, 0
  %v49 = vsub.s32 0, %v44
  %v50 = vsel %vm48, %v49, %v44
  %v51 = vshrl.u32 %v50, 4
  %v52 = vand.u32 %v50, 15
  %v53 = vsub.s32 0, %v52
  %v54 = vsel %vm48, %v53, %v52
  %vm55 = vcmp.lt.s32.totalorder %v45, 0
  %v56 = vsub.s32 0, %v45
  %v57 = vsel %vm55, %v56, %v45
  %v58 = vshrl.u32 %v57, 4
  %v59 = vand.u32 %v57, 15
  %v60 = vsub.s32 0, %v59
  %v61 = vsel %vm55, %v60, %v59
  %vm62 = vcmp.lt.s32.totalorder %v46, 0
  %v63 = vsub.s32 0, %v46
  %v64 = vsel %vm62, %v63, %v46
  %v65 = vshrl.u32 %v64, 4
  %v66 = vand.u32 %v64, 15
  %v67 = vsub.s32 0, %v66
  %v68 = vsel %vm62, %v67, %v66
  %vm69 = vcmp.lt.s32.totalorder %v47, 0
  %v70 = vsub.s32 0, %v47
  %v71 = vsel %vm69, %v70, %v47
  %v72 = vshrl.u32 %v71, 4
  %v73 = vand.u32 %v71, 15
  %v74 = vsub.s32 0, %v73
  %v75 = vsel %vm69, %v74, %v73
  %vm76 = vcmp.ne.s32.totalorder %v54, 0
  %vm77 = vcmp.ne.s32.totalorder %v61, 0
  %vm78 = vcmp.ne.s32.totalorder %v68, 0
  %vm79 = vcmp.ne.s32.totalorder %v75, 0
  %vm80 = vcmp.lt.s32.totalorder %v54, 0
  %vm81 = vcmp.lt.s32.totalorder %v61, 0
  %vm82 = vcmp.lt.s32.totalorder %v68, 0
  %vm83 = vcmp.lt.s32.totalorder %v75, 0
  %vm84 = vmand %vm80, %vm76
  %vm85 = vmand %vm81, %vm77
  %vm86 = vmand %vm82, %vm78
  %vm87 = vmand %vm83, %vm79
  %v88 = vadd.s32 %v54, 16
  %v89 = vadd.s32 %v61, 16
  %v90 = vadd.s32 %v68, 16
  %v91 = vadd.s32 %v75, 16
  %v92 = vsel %vm84, %v88, %v54
  %v93 = vsel %vm85, %v89, %v61
  %v94 = vsel %vm86, %v90, %v68
  %v95 = vsel %vm87, %v91, %v75
  %v96 = vadd.s32 %v92, 4294967295
  %v97 = vadd.s32 %v93, 4294967295
  %v98 = vadd.s32 %v94, 4294967295
  %v99 = vadd.s32 %v95, 4294967295
  %vm100 = vcmp.ge.s32.totalorder %v96, 0
  %vm101 = vcmp.ge.s32.totalorder %v97, 0
  %vm102 = vcmp.ge.s32.totalorder %v98, 0
  %vm103 = vcmp.ge.s32.totalorder %v99, 0
  %vm104 = vcmp.lt.s32.totalorder %v96, 16
  %vm105 = vcmp.lt.s32.totalorder %v97, 16
  %vm106 = vcmp.lt.s32.totalorder %v98, 16
  %vm107 = vcmp.lt.s32.totalorder %v99, 16
  %vm108 = vmand %vm100, %vm104
  %vm109 = vmand %vm101, %vm105
  %vm110 = vmand %vm102, %vm106
  %vm111 = vmand %vm103, %vm107
  %v112 = vsel %vm108, 1, 0
  %v113 = vsel %vm109, 1, 0
  %v114 = vsel %vm110, 1, 0
  %v115 = vsel %vm111, 1, 0
  %vm116 = vcmp.eq.s32.totalorder %v112, 1
  %vm117 = vcmp.eq.s32.totalorder %v113, 1
  %vm118 = vcmp.eq.s32.totalorder %v114, 1
  %vm119 = vcmp.eq.s32.totalorder %v115, 1
  %v120 = vsel %vm116, 1, 0
  %v121 = vsel %vm117, 1, 0
  %v122 = vsel %vm118, 1, 0
  %v123 = vsel %vm119, 1, 0
  %v124 = vcvt.s32.f32 %v120
  %v125 = vcvt.s32.f32 %v121
  %v126 = vcvt.s32.f32 %v122
  %v127 = vcvt.s32.f32 %v123
  %v128 = vadd.s32 %v92, 1
  %v129 = vadd.s32 %v93, 1
  %v130 = vadd.s32 %v94, 1
  %v131 = vadd.s32 %v95, 1
  %vm132 = vcmp.ge.s32.totalorder %v128, 0
  %vm133 = vcmp.ge.s32.totalorder %v129, 0
  %vm134 = vcmp.ge.s32.totalorder %v130, 0
  %vm135 = vcmp.ge.s32.totalorder %v131, 0
  %vm136 = vcmp.lt.s32.totalorder %v128, 16
  %vm137 = vcmp.lt.s32.totalorder %v129, 16
  %vm138 = vcmp.lt.s32.totalorder %v130, 16
  %vm139 = vcmp.lt.s32.totalorder %v131, 16
  %vm140 = vmand %vm132, %vm136
  %vm141 = vmand %vm133, %vm137
  %vm142 = vmand %vm134, %vm138
  %vm143 = vmand %vm135, %vm139
  %v144 = vsel %vm140, 1, 0
  %v145 = vsel %vm141, 1, 0
  %v146 = vsel %vm142, 1, 0
  %v147 = vsel %vm143, 1, 0
  %vm148 = vcmp.eq.s32.totalorder %v144, 1
  %vm149 = vcmp.eq.s32.totalorder %v145, 1
  %vm150 = vcmp.eq.s32.totalorder %v146, 1
  %vm151 = vcmp.eq.s32.totalorder %v147, 1
  %v152 = vsel %vm148, 1, 0
  %v153 = vsel %vm149, 1, 0
  %v154 = vsel %vm150, 1, 0
  %v155 = vsel %vm151, 1, 0
  %v156 = vcvt.s32.f32 %v152
  %v157 = vcvt.s32.f32 %v153
  %v158 = vcvt.s32.f32 %v154
  %v159 = vcvt.s32.f32 %v155
  %v160 = vlaneseq
  %v161 = vand.u32 %v160, 127
  %vm162 = vcmp.lt.s32.totalorder %v161, 32
  %v163 = vrot.slane %v27, 7
  %v164 = vrot.slane %v28, 7
  %v165 = vrot.slane %v29, 7
  %v166 = vrot.slane %v30, 7
  %vm167 = vcmp.lt.s32.totalorder %v44, 1
  %v168 = vsel %vm167, %v165, %v166
  %v169 = vsel %vm167, %v164, %v165
  %v170 = vsel %vm167, %v163, %v164
  %v171 = vsel %vm167, %v166, %v163
  %v172 = vmul.f32 %v171, %v124
  %v173 = vmul.f32 %v170, %v125
  %v174 = vmul.f32 %v169, %v126
  %v175 = vmul.f32 %v168, %v127
  %v176 = vrot.slane %v27, 1
  %v177 = vrot.slane %v28, 1
  %v178 = vrot.slane %v29, 1
  %v179 = vrot.slane %v30, 1
  %vm180 = vcmp.lt.s32.totalorder %v44, 7
  %v181 = vsel %vm180, %v178, %v179
  %v182 = vsel %vm180, %v177, %v178
  %v183 = vsel %vm180, %v176, %v177
  %v184 = vsel %vm180, %v179, %v176
  %v185 = vmul.f32 %v183, %v156
  %v186 = vmul.f32 %v182, %v157
  %v187 = vmul.f32 %v181, %v158
  %v188 = vmul.f32 %v184, %v159
  %193 = vrot.lane.b32.xlu0 %v27, 64
  %v194 = vpop.permute.xlu0 %193
  %195 = vrot.lane.b32.xlu0 %v28, 64
  %v196 = vpop.permute.xlu0 %195
  %197 = vrot.lane.b32.xlu0 %v29, 64
  %v198 = vpop.permute.xlu0 %197
  %199 = vrot.lane.b32.xlu0 %v30, 64
  %v200 = vpop.permute.xlu0 %199
  %vm205 = vcmask 523264
  %v206 = vsel %vm205, %v172, %v194
  %v207 = vsel %vm205, %v173, %v196
  %v208 = vsel %vm205, %v174, %v198
  %v209 = vsel %vm205, %v175, %v200
  %v210 = vpack.c.bf16 %v207, %v206
  %v211 = vpack.c.bf16 %v186, %v185
  %v212 = vpack.c.bf16 %v209, %v208
  %v213 = vpack.c.bf16 %v188, %v187
  %v214 = vld [vmem:[%s2] sm:$0xf]
  %v215 = vld [vmem:[%s2 + $0x4] sm:$0xf]
  %v216 = vld [vmem:[%s2 + $0x8] sm:$0xf]
  %v217 = vld [vmem:[%s2 + $0xc] sm:$0xf]
  %v218 = vld [vmem:[%s2 + $0x10] sm:$0xf]
  %v219 = vld [vmem:[%s2 + $0x14] sm:$0xf]
  %v220 = vld [vmem:[%s2 + $0x18] sm:$0xf]
  %v221 = vld [vmem:[%s2 + $0x1c] sm:$0xf]
  %v222 = vld [vmem:[%s2 + $0x20] sm:$0xf]
  %v223 = vld [vmem:[%s2 + $0x24] sm:$0xf]
  %v224 = vld [vmem:[%s2 + $0x28] sm:$0xf]
  %v225 = vld [vmem:[%s2 + $0x2c] sm:$0xf]
  %v226 = vld [vmem:[%s2 + $0x30] sm:$0xf]
  %v227 = vld [vmem:[%s2 + $0x34] sm:$0xf]
  %v228 = vld [vmem:[%s2 + $0x38] sm:$0xf]
  %v229 = vld [vmem:[%s2 + $0x3c] sm:$0xf]
  %v230 = vld [vmem:[%s2 + $0x40] sm:$0xf]
  %v231 = vld [vmem:[%s2 + $0x44] sm:$0xf]
  %v232 = vld [vmem:[%s2 + $0x48] sm:$0xf]
  %v233 = vld [vmem:[%s2 + $0x4c] sm:$0xf]
  %v234 = vld [vmem:[%s2 + $0x50] sm:$0xf]
  %v235 = vld [vmem:[%s2 + $0x54] sm:$0xf]
  %v236 = vld [vmem:[%s2 + $0x58] sm:$0xf]
  %v237 = vld [vmem:[%s2 + $0x5c] sm:$0xf]
  %v238 = vld [vmem:[%s3] sm:$0x1]
  %v240 = vlaneseq
  %v241 = vshrl.u32 %v240, 7
  %v242 = vsub.s32 0, %v241
  %v243 = vrot.slane %v238, %v242
  %v269 = vunpack.c.l.b16 %v214
  %v270 = vunpack.c.l.b16 %v215
  %v271 = vunpack.c.l.b16 %v216
  %v272 = vunpack.c.l.b16 %v217
  %v273 = vunpack.c.l.b16 %v218
  %v274 = vunpack.c.l.b16 %v219
  %v275 = vunpack.c.l.b16 %v220
  %v276 = vunpack.c.l.b16 %v221
  %v277 = vunpack.c.l.b16 %v222
  %v278 = vunpack.c.l.b16 %v223
  %v279 = vunpack.c.l.b16 %v224
  %v280 = vunpack.c.l.b16 %v225
  %v281 = vunpack.c.l.b16 %v226
  %v282 = vunpack.c.l.b16 %v227
  %v283 = vunpack.c.l.b16 %v228
  %v284 = vunpack.c.l.b16 %v229
  %v285 = vunpack.c.l.b16 %v230
  %v286 = vunpack.c.l.b16 %v231
  %v287 = vunpack.c.l.b16 %v232
  %v288 = vunpack.c.l.b16 %v233
  %v289 = vunpack.c.l.b16 %v234
  %v290 = vunpack.c.l.b16 %v235
  %v291 = vunpack.c.l.b16 %v236
  %v292 = vunpack.c.l.b16 %v237
  %v293 = vpack.c.b16 %v270, %v269
  %v294 = vpack.c.b16 %v272, %v271
  %v295 = vpack.c.b16 %v274, %v273
  %v296 = vpack.c.b16 %v276, %v275
  %v297 = vpack.c.b16 %v278, %v277
  %v298 = vpack.c.b16 %v280, %v279
  %v299 = vpack.c.b16 %v282, %v281
  %v300 = vpack.c.b16 %v284, %v283
  %v301 = vpack.c.b16 %v286, %v285
  %v302 = vpack.c.b16 %v288, %v287
  %v303 = vpack.c.b16 %v290, %v289
  %v304 = vpack.c.b16 %v292, %v291
  %v318 = vsel %vm205, %v211, 0
  %v321 = vsel %vm205, %v213, 0
  %323 = vmatprep.subr.bf16.mxu0 0
  %324 = vmatpush1.bf16.msra.mxu0 %v293
  %325 = vmatprep.subr.bf16.mxu0 0
  %326 = vmatpush1.bf16.msra.mxu0 %v294
  %327 = vmatprep.subr.bf16.mxu0 0
  %328 = vmatpush1.bf16.msra.mxu0 %v295
  %329 = vmatprep.subr.bf16.mxu0 0
  %330 = vmatpush1.bf16.msra.mxu0 %v296
  %331 = vmatprep.subr.bf16.mxu0 0
  %332 = vmatpush1.bf16.msra.mxu0 %v297
  %333 = vmatprep.subr.bf16.mxu0 0
  %334 = vmatpush1.bf16.msra.mxu0 %v298
  %335 = vmatprep.subr.bf16.mxu0 0
  %336 = vmatpush1.bf16.msra.mxu0 %v299
  %337 = vmatprep.subr.bf16.mxu0 0
  %338 = vmatpush1.bf16.msra.mxu0 %v300
  %339 = vmatprep.subr.bf16.mxu0 0
  %340 = vmatpush1.bf16.msra.mxu0 %v301
  %341 = vmatprep.subr.bf16.mxu0 0
  %342 = vmatpush1.bf16.msra.mxu0 %v302
  %343 = vmatprep.subr.bf16.mxu0 0
  %344 = vmatpush1.bf16.msra.mxu0 %v303
  %345 = vmatprep.subr.bf16.mxu0 0
  %346 = vmatpush1.bf16.msra.mxu0 %v304
  %347 = vmatprep.subr.bf16.mxu0 0
  %348 = vmatpush1.bf16.msra.mxu0 0
  %349 = vmatprep.subr.bf16.mxu0 0
  %350 = vmatpush1.bf16.msra.mxu0 0
  %351 = vmatprep.subr.bf16.mxu0 0
  %352 = vmatpush1.bf16.msra.mxu0 0
  %353 = vmatprep.subr.bf16.mxu0 0
  %354 = vmatpush1.bf16.msra.mxu0 0
  %355 = vmatprep.mubr.bf16.mxu0 %v318
  %356 = vmatmul.mubr.bf16.gmra.mrb[0].mxu0 %v210
  %v357 = vpop.f32.mrb[0].mxu0
  %v358 = vadd.f32 %v243, %v357
  %v359 = vpop.f32.mrb[0].mxu0
  %v360 = vpop.f32.mrb[0].mxu0
  %v361 = vadd.f32 %v243, %v360
  %v362 = vpop.f32.mrb[0].mxu0
  %363 = vmatprep.mubr.bf16.mxu0 %v321
  %364 = vmatmul.mubr.bf16.gmra.mrb[0].mxu0 %v212
  %v365 = vpop.f32.mrb[0].mxu0
  %v366 = vadd.f32 %v243, %v365
  %v367 = vpop.f32.mrb[0].mxu0
  %v368 = vpop.f32.mrb[0].mxu0
  %v369 = vadd.f32 %v243, %v368
  %v370 = vpop.f32.mrb[0].mxu0
  %371 = vdwg.mxu0
  %v372 = vmul.f32 %v358, 0.01
  %v373 = vmul.f32 %v361, 0.01
  %v374 = vmul.f32 %v366, 0.01
  %v375 = vmul.f32 %v369, 0.01
  %v376 = vmax.f32 %v358, %v372
  %v377 = vmax.f32 %v361, %v373
  %v378 = vmax.f32 %v366, %v374
  %v379 = vmax.f32 %v369, %v375
  %v380 = vrot.slane %v376, 7
  %v381 = vrot.slane %v377, 7
  %v382 = vrot.slane %v378, 7
  %v383 = vrot.slane %v379, 7
  %v384 = vsel %vm167, %v382, %v383
  %v385 = vsel %vm167, %v381, %v382
  %v386 = vsel %vm167, %v380, %v381
  %v387 = vsel %vm167, %v383, %v380
  %v388 = vmul.f32 %v387, %v124
  %v389 = vmul.f32 %v386, %v125
  %v390 = vmul.f32 %v385, %v126
  %v391 = vmul.f32 %v384, %v127
  %v392 = vrot.slane %v376, 1
  %v393 = vrot.slane %v377, 1
  %v394 = vrot.slane %v378, 1
  %v395 = vrot.slane %v379, 1
  %v396 = vsel %vm180, %v394, %v395
  %v397 = vsel %vm180, %v393, %v394
  %v398 = vsel %vm180, %v392, %v393
  %v399 = vsel %vm180, %v395, %v392
  %v400 = vmul.f32 %v398, %v156
  %v401 = vmul.f32 %v397, %v157
  %v402 = vmul.f32 %v396, %v158
  %v403 = vmul.f32 %v399, %v159
  %408 = vrot.lane.b32.xlu0 %v376, 64
  %v409 = vpop.permute.xlu0 %408
  %410 = vrot.lane.b32.xlu0 %v377, 64
  %v411 = vpop.permute.xlu0 %410
  %412 = vrot.lane.b32.xlu0 %v378, 64
  %v413 = vpop.permute.xlu0 %412
  %414 = vrot.lane.b32.xlu0 %v379, 64
  %v415 = vpop.permute.xlu0 %414
  %v420 = vsel %vm205, %v388, %v409
  %v421 = vsel %vm205, %v389, %v411
  %v422 = vsel %vm205, %v390, %v413
  %v423 = vsel %vm205, %v391, %v415
  %v424 = vpack.c.bf16 %v421, %v420
  %v425 = vpack.c.bf16 %v401, %v400
  %v426 = vpack.c.bf16 %v423, %v422
  %v427 = vpack.c.bf16 %v403, %v402
  %s428 = scalar_lea.vmem %s2, 96
  %v429 = vld [vmem:[%s428] sm:$0xf]
  %v430 = vld [vmem:[%s428 + $0x4] sm:$0xf]
  %v431 = vld [vmem:[%s428 + $0x8] sm:$0xf]
  %v432 = vld [vmem:[%s428 + $0xc] sm:$0xf]
  %v433 = vld [vmem:[%s428 + $0x10] sm:$0xf]
  %v434 = vld [vmem:[%s428 + $0x14] sm:$0xf]
  %v435 = vld [vmem:[%s428 + $0x18] sm:$0xf]
  %v436 = vld [vmem:[%s428 + $0x1c] sm:$0xf]
  %v437 = vld [vmem:[%s428 + $0x20] sm:$0xf]
  %v438 = vld [vmem:[%s428 + $0x24] sm:$0xf]
  %v439 = vld [vmem:[%s428 + $0x28] sm:$0xf]
  %v440 = vld [vmem:[%s428 + $0x2c] sm:$0xf]
  %v441 = vld [vmem:[%s428 + $0x30] sm:$0xf]
  %v442 = vld [vmem:[%s428 + $0x34] sm:$0xf]
  %v443 = vld [vmem:[%s428 + $0x38] sm:$0xf]
  %v444 = vld [vmem:[%s428 + $0x3c] sm:$0xf]
  %v445 = vld [vmem:[%s428 + $0x40] sm:$0xf]
  %v446 = vld [vmem:[%s428 + $0x44] sm:$0xf]
  %v447 = vld [vmem:[%s428 + $0x48] sm:$0xf]
  %v448 = vld [vmem:[%s428 + $0x4c] sm:$0xf]
  %v449 = vld [vmem:[%s428 + $0x50] sm:$0xf]
  %v450 = vld [vmem:[%s428 + $0x54] sm:$0xf]
  %v451 = vld [vmem:[%s428 + $0x58] sm:$0xf]
  %v452 = vld [vmem:[%s428 + $0x5c] sm:$0xf]
  %s453 = scalar_lea.vmem %s3, 1
  %v454 = vld [vmem:[%s453] sm:$0x1]
  %v456 = vlaneseq
  %v457 = vshrl.u32 %v456, 7
  %v458 = vsub.s32 0, %v457
  %v459 = vrot.slane %v454, %v458
  %v485 = vunpack.c.l.b16 %v429
  %v486 = vunpack.c.l.b16 %v430
  %v487 = vunpack.c.l.b16 %v431
  %v488 = vunpack.c.l.b16 %v432
  %v489 = vunpack.c.l.b16 %v433
  %v490 = vunpack.c.l.b16 %v434
  %v491 = vunpack.c.l.b16 %v435
  %v492 = vunpack.c.l.b16 %v436
  %v493 = vunpack.c.l.b16 %v437
  %v494 = vunpack.c.l.b16 %v438
  %v495 = vunpack.c.l.b16 %v439
  %v496 = vunpack.c.l.b16 %v440
  %v497 = vunpack.c.l.b16 %v441
  %v498 = vunpack.c.l.b16 %v442
  %v499 = vunpack.c.l.b16 %v443
  %v500 = vunpack.c.l.b16 %v444
  %v501 = vunpack.c.l.b16 %v445
  %v502 = vunpack.c.l.b16 %v446
  %v503 = vunpack.c.l.b16 %v447
  %v504 = vunpack.c.l.b16 %v448
  %v505 = vunpack.c.l.b16 %v449
  %v506 = vunpack.c.l.b16 %v450
  %v507 = vunpack.c.l.b16 %v451
  %v508 = vunpack.c.l.b16 %v452
  %v509 = vpack.c.b16 %v486, %v485
  %v510 = vpack.c.b16 %v488, %v487
  %v511 = vpack.c.b16 %v490, %v489
  %v512 = vpack.c.b16 %v492, %v491
  %v513 = vpack.c.b16 %v494, %v493
  %v514 = vpack.c.b16 %v496, %v495
  %v515 = vpack.c.b16 %v498, %v497
  %v516 = vpack.c.b16 %v500, %v499
  %v517 = vpack.c.b16 %v502, %v501
  %v518 = vpack.c.b16 %v504, %v503
  %v519 = vpack.c.b16 %v506, %v505
  %v520 = vpack.c.b16 %v508, %v507
  %v534 = vsel %vm205, %v425, 0
  %v537 = vsel %vm205, %v427, 0
  %539 = vmatprep.subr.bf16.mxu0 0
  %540 = vmatpush1.bf16.msra.mxu0 %v509
  %541 = vmatprep.subr.bf16.mxu0 0
  %542 = vmatpush1.bf16.msra.mxu0 %v510
  %543 = vmatprep.subr.bf16.mxu0 0
  %544 = vmatpush1.bf16.msra.mxu0 %v511
  %545 = vmatprep.subr.bf16.mxu0 0
  %546 = vmatpush1.bf16.msra.mxu0 %v512
  %547 = vmatprep.subr.bf16.mxu0 0
  %548 = vmatpush1.bf16.msra.mxu0 %v513
  %549 = vmatprep.subr.bf16.mxu0 0
  %550 = vmatpush1.bf16.msra.mxu0 %v514
  %551 = vmatprep.subr.bf16.mxu0 0
  %552 = vmatpush1.bf16.msra.mxu0 %v515
  %553 = vmatprep.subr.bf16.mxu0 0
  %554 = vmatpush1.bf16.msra.mxu0 %v516
  %555 = vmatprep.subr.bf16.mxu0 0
  %556 = vmatpush1.bf16.msra.mxu0 %v517
  %557 = vmatprep.subr.bf16.mxu0 0
  %558 = vmatpush1.bf16.msra.mxu0 %v518
  %559 = vmatprep.subr.bf16.mxu0 0
  %560 = vmatpush1.bf16.msra.mxu0 %v519
  %561 = vmatprep.subr.bf16.mxu0 0
  %562 = vmatpush1.bf16.msra.mxu0 %v520
  %563 = vmatprep.subr.bf16.mxu0 0
  %564 = vmatpush1.bf16.msra.mxu0 0
  %565 = vmatprep.subr.bf16.mxu0 0
  %566 = vmatpush1.bf16.msra.mxu0 0
  %567 = vmatprep.subr.bf16.mxu0 0
  %568 = vmatpush1.bf16.msra.mxu0 0
  %569 = vmatprep.subr.bf16.mxu0 0
  %570 = vmatpush1.bf16.msra.mxu0 0
  %571 = vmatprep.mubr.bf16.mxu0 %v534
  %572 = vmatmul.mubr.bf16.gmra.mrb[0].mxu0 %v424
  %v573 = vpop.f32.mrb[0].mxu0
  %v574 = vadd.f32 %v459, %v573
  %v575 = vpop.f32.mrb[0].mxu0
  %v576 = vpop.f32.mrb[0].mxu0
  %v577 = vadd.f32 %v459, %v576
  %v578 = vpop.f32.mrb[0].mxu0
  %579 = vmatprep.mubr.bf16.mxu0 %v537
  %580 = vmatmul.mubr.bf16.gmra.mrb[0].mxu0 %v426
  %v581 = vpop.f32.mrb[0].mxu0
  %v582 = vadd.f32 %v459, %v581
  %v583 = vpop.f32.mrb[0].mxu0
  %v584 = vpop.f32.mrb[0].mxu0
  %v585 = vadd.f32 %v459, %v584
  %v586 = vpop.f32.mrb[0].mxu0
  %587 = vdwg.mxu0
  %v588 = vmul.f32 %v574, 0.01
  %v589 = vmul.f32 %v577, 0.01
  %v590 = vmul.f32 %v582, 0.01
  %v591 = vmul.f32 %v585, 0.01
  %v592 = vmax.f32 %v574, %v588
  %v593 = vmax.f32 %v577, %v589
  %v594 = vmax.f32 %v582, %v590
  %v595 = vmax.f32 %v585, %v591
  %v596 = vadd.f32 %v592, %v27
  %v597 = vadd.f32 %v593, %v28
  %v598 = vadd.f32 %v594, %v29
  %v599 = vadd.f32 %v595, %v30
  %v600 = vpack.c.bf16 %v597, %v596
  %v601 = vpack.c.bf16 %v599, %v598
  %v602 = vld [vmem:[%s5] sm:$0xf]
  %v603 = vld [vmem:[%s5 + $0x4] sm:$0xf]
  %v604 = vld [vmem:[%s5 + $0x8] sm:$0xf]
  %v605 = vld [vmem:[%s5 + $0xc] sm:$0xf]
  %v606 = vld [vmem:[%s5 + $0x10] sm:$0xf]
  %v607 = vld [vmem:[%s5 + $0x14] sm:$0xf]
  %v608 = vld [vmem:[%s5 + $0x18] sm:$0xf]
  %v609 = vld [vmem:[%s5 + $0x1c] sm:$0xf]
  %v610 = vld [vmem:[%s4] sm:$0xf]
  %v611 = vld [vmem:[%s4 + $0x4] sm:$0xf]
  %v612 = vld [vmem:[%s4 + $0x8] sm:$0xf]
  %v613 = vld [vmem:[%s4 + $0xc] sm:$0xf]
  %v618 = vunpack.c.l.b16 %v610
  %v619 = vunpack.c.l.b16 %v611
  %v620 = vunpack.c.l.b16 %v612
  %v621 = vunpack.c.l.b16 %v613
  %v622 = vpack.c.b16 %v619, %v618
  %v623 = vpack.c.b16 %v621, %v620
  %vm626 = vcmask 261120
  %v628 = vsel %vm626, %v41, 0
  %v631 = vsel %vm626, %v42, 0
  %633 = vmatprep.subr.bf16.mxu0 0
  %634 = vmatpush1.bf16.msra.mxu0 %v622
  %635 = vmatprep.subr.bf16.mxu0 0
  %636 = vmatpush1.bf16.msra.mxu0 %v623
  %637 = vmatprep.subr.bf16.mxu0 0
  %638 = vmatpush1.bf16.msra.mxu0 0
  %639 = vmatprep.subr.bf16.mxu0 0
  %640 = vmatpush1.bf16.msra.mxu0 0
  %641 = vmatprep.subr.bf16.mxu0 0
  %642 = vmatpush1.bf16.msra.mxu0 0
  %643 = vmatprep.subr.bf16.mxu0 0
  %644 = vmatpush1.bf16.msra.mxu0 0
  %645 = vmatprep.subr.bf16.mxu0 0
  %646 = vmatpush1.bf16.msra.mxu0 0
  %647 = vmatprep.subr.bf16.mxu0 0
  %648 = vmatpush1.bf16.msra.mxu0 0
  %649 = vmatprep.subr.bf16.mxu0 0
  %650 = vmatpush1.bf16.msra.mxu0 0
  %651 = vmatprep.subr.bf16.mxu0 0
  %652 = vmatpush1.bf16.msra.mxu0 0
  %653 = vmatprep.subr.bf16.mxu0 0
  %654 = vmatpush1.bf16.msra.mxu0 0
  %655 = vmatprep.subr.bf16.mxu0 0
  %656 = vmatpush1.bf16.msra.mxu0 0
  %657 = vmatprep.subr.bf16.mxu0 0
  %658 = vmatpush1.bf16.msra.mxu0 0
  %659 = vmatprep.subr.bf16.mxu0 0
  %660 = vmatpush1.bf16.msra.mxu0 0
  %661 = vmatprep.subr.bf16.mxu0 0
  %662 = vmatpush1.bf16.msra.mxu0 0
  %663 = vmatprep.subr.bf16.mxu0 0
  %664 = vmatpush1.bf16.msra.mxu0 0
  %665 = vmatprep.mubr.bf16.mxu0 0
  %666 = vmatmul.mubr.bf16.gmra.mrb[0].mxu0 %v628
  %v667 = vpop.f32.mrb[0].mxu0
  %v668 = vadd.f32 0.0, %v667
  %v669 = vpop.f32.mrb[0].mxu0
  %v670 = vpop.f32.mrb[0].mxu0
  %v671 = vadd.f32 0.0, %v670
  %v672 = vpop.f32.mrb[0].mxu0
  %673 = vmatprep.mubr.bf16.mxu0 0
  %674 = vmatmul.mubr.bf16.gmra.mrb[0].mxu0 %v631
  %v675 = vpop.f32.mrb[0].mxu0
  %v676 = vadd.f32 0.0, %v675
  %v677 = vpop.f32.mrb[0].mxu0
  %v678 = vpop.f32.mrb[0].mxu0
  %v679 = vadd.f32 0.0, %v678
  %v680 = vpop.f32.mrb[0].mxu0
  %681 = vdwg.mxu0
  %v690 = vunpack.c.l.b16 %v602
  %v691 = vunpack.c.l.b16 %v603
  %v692 = vunpack.c.l.b16 %v604
  %v693 = vunpack.c.l.b16 %v605
  %v694 = vunpack.c.l.b16 %v606
  %v695 = vunpack.c.l.b16 %v607
  %v696 = vunpack.c.l.b16 %v608
  %v697 = vunpack.c.l.b16 %v609
  %v698 = vpack.c.b16 %v691, %v690
  %v699 = vpack.c.b16 %v693, %v692
  %v700 = vpack.c.b16 %v695, %v694
  %v701 = vpack.c.b16 %v697, %v696
  %v707 = vsel %vm205, %v600, 0
  %v710 = vsel %vm205, %v601, 0
  %712 = vmatprep.subr.bf16.mxu0 0
  %713 = vmatpush1.bf16.msra.mxu0 %v698
  %714 = vmatprep.subr.bf16.mxu0 0
  %715 = vmatpush1.bf16.msra.mxu0 %v699
  %716 = vmatprep.subr.bf16.mxu0 0
  %717 = vmatpush1.bf16.msra.mxu0 %v700
  %718 = vmatprep.subr.bf16.mxu0 0
  %719 = vmatpush1.bf16.msra.mxu0 %v701
  %720 = vmatprep.subr.bf16.mxu0 0
  %721 = vmatpush1.bf16.msra.mxu0 0
  %722 = vmatprep.subr.bf16.mxu0 0
  %723 = vmatpush1.bf16.msra.mxu0 0
  %724 = vmatprep.subr.bf16.mxu0 0
  %725 = vmatpush1.bf16.msra.mxu0 0
  %726 = vmatprep.subr.bf16.mxu0 0
  %727 = vmatpush1.bf16.msra.mxu0 0
  %728 = vmatprep.subr.bf16.mxu0 0
  %729 = vmatpush1.bf16.msra.mxu0 0
  %730 = vmatprep.subr.bf16.mxu0 0
  %731 = vmatpush1.bf16.msra.mxu0 0
  %732 = vmatprep.subr.bf16.mxu0 0
  %733 = vmatpush1.bf16.msra.mxu0 0
  %734 = vmatprep.subr.bf16.mxu0 0
  %735 = vmatpush1.bf16.msra.mxu0 0
  %736 = vmatprep.subr.bf16.mxu0 0
  %737 = vmatpush1.bf16.msra.mxu0 0
  %738 = vmatprep.subr.bf16.mxu0 0
  %739 = vmatpush1.bf16.msra.mxu0 0
  %740 = vmatprep.subr.bf16.mxu0 0
  %741 = vmatpush1.bf16.msra.mxu0 0
  %742 = vmatprep.subr.bf16.mxu0 0
  %743 = vmatpush1.bf16.msra.mxu0 0
  %744 = vmatprep.mubr.bf16.mxu0 0
  %745 = vmatmul.mubr.bf16.gmra.mrb[0].mxu0 %v707
  %v746 = vpop.f32.mrb[0].mxu0
  %v747 = vadd.f32 %v668, %v746
  %v748 = vpop.f32.mrb[0].mxu0
  %v749 = vpop.f32.mrb[0].mxu0
  %v750 = vadd.f32 %v671, %v749
  %v751 = vpop.f32.mrb[0].mxu0
  %752 = vmatprep.mubr.bf16.mxu0 0
  %753 = vmatmul.mubr.bf16.gmra.mrb[0].mxu0 %v710
  %v754 = vpop.f32.mrb[0].mxu0
  %v755 = vadd.f32 %v676, %v754
  %v756 = vpop.f32.mrb[0].mxu0
  %v757 = vpop.f32.mrb[0].mxu0
  %v758 = vadd.f32 %v679, %v757
  %v759 = vpop.f32.mrb[0].mxu0
  %760 = vdwg.mxu0
  %v761 = vld [vmem:[%s6] sm:$0x1]
  %v763 = vlaneseq
  %v764 = vshrl.u32 %v763, 7
  %v765 = vsub.s32 0, %v764
  %v766 = vrot.slane %v761, %v765
  %v768 = vadd.f32 %v747, %v766
  %v769 = vadd.f32 %v750, %v766
  %v770 = vadd.f32 %v755, %v766
  %v771 = vadd.f32 %v758, %v766
  %v772 = vsel %vm162, %v596, %v27
  %v773 = vsel %vm162, %v597, %v28
  %v774 = vsel %vm162, %v598, %v29
  %v775 = vsel %vm162, %v599, %v30
  %v776 = vadd.f32 %v772, %v768
  %v777 = vadd.f32 %v773, %v769
  %v778 = vadd.f32 %v774, %v770
  %v779 = vadd.f32 %v775, %v771
  %v780 = vrot.slane %v776, 7
  %v781 = vrot.slane %v777, 7
  %v782 = vrot.slane %v778, 7
  %v783 = vrot.slane %v779, 7
  %v784 = vsel %vm167, %v782, %v783
  %v785 = vsel %vm167, %v781, %v782
  %v786 = vsel %vm167, %v780, %v781
  %v787 = vsel %vm167, %v783, %v780
  %v788 = vmul.f32 %v787, %v124
  %v789 = vmul.f32 %v786, %v125
  %v790 = vmul.f32 %v785, %v126
  %v791 = vmul.f32 %v784, %v127
  %v792 = vrot.slane %v776, 1
  %v793 = vrot.slane %v777, 1
  %v794 = vrot.slane %v778, 1
  %v795 = vrot.slane %v779, 1
  %v796 = vsel %vm180, %v794, %v795
  %v797 = vsel %vm180, %v793, %v794
  %v798 = vsel %vm180, %v792, %v793
  %v799 = vsel %vm180, %v795, %v792
  %v800 = vmul.f32 %v798, %v156
  %v801 = vmul.f32 %v797, %v157
  %v802 = vmul.f32 %v796, %v158
  %v803 = vmul.f32 %v799, %v159
  %808 = vrot.lane.b32.xlu0 %v776, 64
  %v809 = vpop.permute.xlu0 %808
  %810 = vrot.lane.b32.xlu0 %v777, 64
  %v811 = vpop.permute.xlu0 %810
  %812 = vrot.lane.b32.xlu0 %v778, 64
  %v813 = vpop.permute.xlu0 %812
  %814 = vrot.lane.b32.xlu0 %v779, 64
  %v815 = vpop.permute.xlu0 %814
  %v820 = vsel %vm205, %v788, %v809
  %v821 = vsel %vm205, %v789, %v811
  %v822 = vsel %vm205, %v790, %v813
  %v823 = vsel %vm205, %v791, %v815
  %v824 = vpack.c.bf16 %v821, %v820
  %v825 = vpack.c.bf16 %v801, %v800
  %v826 = vpack.c.bf16 %v823, %v822
  %v827 = vpack.c.bf16 %v803, %v802
  %s828 = scalar_lea.vmem %s2, 192
  %v829 = vld [vmem:[%s828] sm:$0xf]
  %v830 = vld [vmem:[%s828 + $0x4] sm:$0xf]
  %v831 = vld [vmem:[%s828 + $0x8] sm:$0xf]
  %v832 = vld [vmem:[%s828 + $0xc] sm:$0xf]
  %v833 = vld [vmem:[%s828 + $0x10] sm:$0xf]
  %v834 = vld [vmem:[%s828 + $0x14] sm:$0xf]
  %v835 = vld [vmem:[%s828 + $0x18] sm:$0xf]
  %v836 = vld [vmem:[%s828 + $0x1c] sm:$0xf]
  %v837 = vld [vmem:[%s828 + $0x20] sm:$0xf]
  %v838 = vld [vmem:[%s828 + $0x24] sm:$0xf]
  %v839 = vld [vmem:[%s828 + $0x28] sm:$0xf]
  %v840 = vld [vmem:[%s828 + $0x2c] sm:$0xf]
  %v841 = vld [vmem:[%s828 + $0x30] sm:$0xf]
  %v842 = vld [vmem:[%s828 + $0x34] sm:$0xf]
  %v843 = vld [vmem:[%s828 + $0x38] sm:$0xf]
  %v844 = vld [vmem:[%s828 + $0x3c] sm:$0xf]
  %v845 = vld [vmem:[%s828 + $0x40] sm:$0xf]
  %v846 = vld [vmem:[%s828 + $0x44] sm:$0xf]
  %v847 = vld [vmem:[%s828 + $0x48] sm:$0xf]
  %v848 = vld [vmem:[%s828 + $0x4c] sm:$0xf]
  %v849 = vld [vmem:[%s828 + $0x50] sm:$0xf]
  %v850 = vld [vmem:[%s828 + $0x54] sm:$0xf]
  %v851 = vld [vmem:[%s828 + $0x58] sm:$0xf]
  %v852 = vld [vmem:[%s828 + $0x5c] sm:$0xf]
  %s853 = scalar_lea.vmem %s3, 2
  %v854 = vld [vmem:[%s853] sm:$0x1]
  %v856 = vlaneseq
  %v857 = vshrl.u32 %v856, 7
  %v858 = vsub.s32 0, %v857
  %v859 = vrot.slane %v854, %v858
  %v885 = vunpack.c.l.b16 %v829
  %v886 = vunpack.c.l.b16 %v830
  %v887 = vunpack.c.l.b16 %v831
  %v888 = vunpack.c.l.b16 %v832
  %v889 = vunpack.c.l.b16 %v833
  %v890 = vunpack.c.l.b16 %v834
  %v891 = vunpack.c.l.b16 %v835
  %v892 = vunpack.c.l.b16 %v836
  %v893 = vunpack.c.l.b16 %v837
  %v894 = vunpack.c.l.b16 %v838
  %v895 = vunpack.c.l.b16 %v839
  %v896 = vunpack.c.l.b16 %v840
  %v897 = vunpack.c.l.b16 %v841
  %v898 = vunpack.c.l.b16 %v842
  %v899 = vunpack.c.l.b16 %v843
  %v900 = vunpack.c.l.b16 %v844
  %v901 = vunpack.c.l.b16 %v845
  %v902 = vunpack.c.l.b16 %v846
  %v903 = vunpack.c.l.b16 %v847
  %v904 = vunpack.c.l.b16 %v848
  %v905 = vunpack.c.l.b16 %v849
  %v906 = vunpack.c.l.b16 %v850
  %v907 = vunpack.c.l.b16 %v851
  %v908 = vunpack.c.l.b16 %v852
  %v909 = vpack.c.b16 %v886, %v885
  %v910 = vpack.c.b16 %v888, %v887
  %v911 = vpack.c.b16 %v890, %v889
  %v912 = vpack.c.b16 %v892, %v891
  %v913 = vpack.c.b16 %v894, %v893
  %v914 = vpack.c.b16 %v896, %v895
  %v915 = vpack.c.b16 %v898, %v897
  %v916 = vpack.c.b16 %v900, %v899
  %v917 = vpack.c.b16 %v902, %v901
  %v918 = vpack.c.b16 %v904, %v903
  %v919 = vpack.c.b16 %v906, %v905
  %v920 = vpack.c.b16 %v908, %v907
  %v934 = vsel %vm205, %v825, 0
  %v937 = vsel %vm205, %v827, 0
  %939 = vmatprep.subr.bf16.mxu0 0
  %940 = vmatpush1.bf16.msra.mxu0 %v909
  %941 = vmatprep.subr.bf16.mxu0 0
  %942 = vmatpush1.bf16.msra.mxu0 %v910
  %943 = vmatprep.subr.bf16.mxu0 0
  %944 = vmatpush1.bf16.msra.mxu0 %v911
  %945 = vmatprep.subr.bf16.mxu0 0
  %946 = vmatpush1.bf16.msra.mxu0 %v912
  %947 = vmatprep.subr.bf16.mxu0 0
  %948 = vmatpush1.bf16.msra.mxu0 %v913
  %949 = vmatprep.subr.bf16.mxu0 0
  %950 = vmatpush1.bf16.msra.mxu0 %v914
  %951 = vmatprep.subr.bf16.mxu0 0
  %952 = vmatpush1.bf16.msra.mxu0 %v915
  %953 = vmatprep.subr.bf16.mxu0 0
  %954 = vmatpush1.bf16.msra.mxu0 %v916
  %955 = vmatprep.subr.bf16.mxu0 0
  %956 = vmatpush1.bf16.msra.mxu0 %v917
  %957 = vmatprep.subr.bf16.mxu0 0
  %958 = vmatpush1.bf16.msra.mxu0 %v918
  %959 = vmatprep.subr.bf16.mxu0 0
  %960 = vmatpush1.bf16.msra.mxu0 %v919
  %961 = vmatprep.subr.bf16.mxu0 0
  %962 = vmatpush1.bf16.msra.mxu0 %v920
  %963 = vmatprep.subr.bf16.mxu0 0
  %964 = vmatpush1.bf16.msra.mxu0 0
  %965 = vmatprep.subr.bf16.mxu0 0
  %966 = vmatpush1.bf16.msra.mxu0 0
  %967 = vmatprep.subr.bf16.mxu0 0
  %968 = vmatpush1.bf16.msra.mxu0 0
  %969 = vmatprep.subr.bf16.mxu0 0
  %970 = vmatpush1.bf16.msra.mxu0 0
  %971 = vmatprep.mubr.bf16.mxu0 %v934
  %972 = vmatmul.mubr.bf16.gmra.mrb[0].mxu0 %v824
  %v973 = vpop.f32.mrb[0].mxu0
  %v974 = vadd.f32 %v859, %v973
  %v975 = vpop.f32.mrb[0].mxu0
  %v976 = vpop.f32.mrb[0].mxu0
  %v977 = vadd.f32 %v859, %v976
  %v978 = vpop.f32.mrb[0].mxu0
  %979 = vmatprep.mubr.bf16.mxu0 %v937
  %980 = vmatmul.mubr.bf16.gmra.mrb[0].mxu0 %v826
  %v981 = vpop.f32.mrb[0].mxu0
  %v982 = vadd.f32 %v859, %v981
  %v983 = vpop.f32.mrb[0].mxu0
  %v984 = vpop.f32.mrb[0].mxu0
  %v985 = vadd.f32 %v859, %v984
  %v986 = vpop.f32.mrb[0].mxu0
  %987 = vdwg.mxu0
  %v988 = vmul.f32 %v974, 0.01
  %v989 = vmul.f32 %v977, 0.01
  %v990 = vmul.f32 %v982, 0.01
  %v991 = vmul.f32 %v985, 0.01
  %v992 = vmax.f32 %v974, %v988
  %v993 = vmax.f32 %v977, %v989
  %v994 = vmax.f32 %v982, %v990
  %v995 = vmax.f32 %v985, %v991
  %v996 = vrot.slane %v992, 7
  %v997 = vrot.slane %v993, 7
  %v998 = vrot.slane %v994, 7
  %v999 = vrot.slane %v995, 7
  %v1000 = vsel %vm167, %v998, %v999
  %v1001 = vsel %vm167, %v997, %v998
  %v1002 = vsel %vm167, %v996, %v997
  %v1003 = vsel %vm167, %v999, %v996
  %v1004 = vmul.f32 %v1003, %v124
  %v1005 = vmul.f32 %v1002, %v125
  %v1006 = vmul.f32 %v1001, %v126
  %v1007 = vmul.f32 %v1000, %v127
  %v1008 = vrot.slane %v992, 1
  %v1009 = vrot.slane %v993, 1
  %v1010 = vrot.slane %v994, 1
  %v1011 = vrot.slane %v995, 1
  %v1012 = vsel %vm180, %v1010, %v1011
  %v1013 = vsel %vm180, %v1009, %v1010
  %v1014 = vsel %vm180, %v1008, %v1009
  %v1015 = vsel %vm180, %v1011, %v1008
  %v1016 = vmul.f32 %v1014, %v156
  %v1017 = vmul.f32 %v1013, %v157
  %v1018 = vmul.f32 %v1012, %v158
  %v1019 = vmul.f32 %v1015, %v159
  %1024 = vrot.lane.b32.xlu0 %v992, 64
  %v1025 = vpop.permute.xlu0 %1024
  %1026 = vrot.lane.b32.xlu0 %v993, 64
  %v1027 = vpop.permute.xlu0 %1026
  %1028 = vrot.lane.b32.xlu0 %v994, 64
  %v1029 = vpop.permute.xlu0 %1028
  %1030 = vrot.lane.b32.xlu0 %v995, 64
  %v1031 = vpop.permute.xlu0 %1030
  %v1036 = vsel %vm205, %v1004, %v1025
  %v1037 = vsel %vm205, %v1005, %v1027
  %v1038 = vsel %vm205, %v1006, %v1029
  %v1039 = vsel %vm205, %v1007, %v1031
  %v1040 = vpack.c.bf16 %v1037, %v1036
  %v1041 = vpack.c.bf16 %v1017, %v1016
  %v1042 = vpack.c.bf16 %v1039, %v1038
  %v1043 = vpack.c.bf16 %v1019, %v1018
  %s1044 = scalar_lea.vmem %s2, 288
  %v1045 = vld [vmem:[%s1044] sm:$0xf]
  %v1046 = vld [vmem:[%s1044 + $0x4] sm:$0xf]
  %v1047 = vld [vmem:[%s1044 + $0x8] sm:$0xf]
  %v1048 = vld [vmem:[%s1044 + $0xc] sm:$0xf]
  %v1049 = vld [vmem:[%s1044 + $0x10] sm:$0xf]
  %v1050 = vld [vmem:[%s1044 + $0x14] sm:$0xf]
  %v1051 = vld [vmem:[%s1044 + $0x18] sm:$0xf]
  %v1052 = vld [vmem:[%s1044 + $0x1c] sm:$0xf]
  %v1053 = vld [vmem:[%s1044 + $0x20] sm:$0xf]
  %v1054 = vld [vmem:[%s1044 + $0x24] sm:$0xf]
  %v1055 = vld [vmem:[%s1044 + $0x28] sm:$0xf]
  %v1056 = vld [vmem:[%s1044 + $0x2c] sm:$0xf]
  %v1057 = vld [vmem:[%s1044 + $0x30] sm:$0xf]
  %v1058 = vld [vmem:[%s1044 + $0x34] sm:$0xf]
  %v1059 = vld [vmem:[%s1044 + $0x38] sm:$0xf]
  %v1060 = vld [vmem:[%s1044 + $0x3c] sm:$0xf]
  %v1061 = vld [vmem:[%s1044 + $0x40] sm:$0xf]
  %v1062 = vld [vmem:[%s1044 + $0x44] sm:$0xf]
  %v1063 = vld [vmem:[%s1044 + $0x48] sm:$0xf]
  %v1064 = vld [vmem:[%s1044 + $0x4c] sm:$0xf]
  %v1065 = vld [vmem:[%s1044 + $0x50] sm:$0xf]
  %v1066 = vld [vmem:[%s1044 + $0x54] sm:$0xf]
  %v1067 = vld [vmem:[%s1044 + $0x58] sm:$0xf]
  %v1068 = vld [vmem:[%s1044 + $0x5c] sm:$0xf]
  %s1069 = scalar_lea.vmem %s3, 3
  %v1070 = vld [vmem:[%s1069] sm:$0x1]
  %v1072 = vlaneseq
  %v1073 = vshrl.u32 %v1072, 7
  %v1074 = vsub.s32 0, %v1073
  %v1075 = vrot.slane %v1070, %v1074
  %v1101 = vunpack.c.l.b16 %v1045
  %v1102 = vunpack.c.l.b16 %v1046
  %v1103 = vunpack.c.l.b16 %v1047
  %v1104 = vunpack.c.l.b16 %v1048
  %v1105 = vunpack.c.l.b16 %v1049
  %v1106 = vunpack.c.l.b16 %v1050
  %v1107 = vunpack.c.l.b16 %v1051
  %v1108 = vunpack.c.l.b16 %v1052
  %v1109 = vunpack.c.l.b16 %v1053
  %v1110 = vunpack.c.l.b16 %v1054
  %v1111 = vunpack.c.l.b16 %v1055
  %v1112 = vunpack.c.l.b16 %v1056
  %v1113 = vunpack.c.l.b16 %v1057
  %v1114 = vunpack.c.l.b16 %v1058
  %v1115 = vunpack.c.l.b16 %v1059
  %v1116 = vunpack.c.l.b16 %v1060
  %v1117 = vunpack.c.l.b16 %v1061
  %v1118 = vunpack.c.l.b16 %v1062
  %v1119 = vunpack.c.l.b16 %v1063
  %v1120 = vunpack.c.l.b16 %v1064
  %v1121 = vunpack.c.l.b16 %v1065
  %v1122 = vunpack.c.l.b16 %v1066
  %v1123 = vunpack.c.l.b16 %v1067
  %v1124 = vunpack.c.l.b16 %v1068
  %v1125 = vpack.c.b16 %v1102, %v1101
  %v1126 = vpack.c.b16 %v1104, %v1103
  %v1127 = vpack.c.b16 %v1106, %v1105
  %v1128 = vpack.c.b16 %v1108, %v1107
  %v1129 = vpack.c.b16 %v1110, %v1109
  %v1130 = vpack.c.b16 %v1112, %v1111
  %v1131 = vpack.c.b16 %v1114, %v1113
  %v1132 = vpack.c.b16 %v1116, %v1115
  %v1133 = vpack.c.b16 %v1118, %v1117
  %v1134 = vpack.c.b16 %v1120, %v1119
  %v1135 = vpack.c.b16 %v1122, %v1121
  %v1136 = vpack.c.b16 %v1124, %v1123
  %v1150 = vsel %vm205, %v1041, 0
  %v1153 = vsel %vm205, %v1043, 0
  %1155 = vmatprep.subr.bf16.mxu0 0
  %1156 = vmatpush1.bf16.msra.mxu0 %v1125
  %1157 = vmatprep.subr.bf16.mxu0 0
  %1158 = vmatpush1.bf16.msra.mxu0 %v1126
  %1159 = vmatprep.subr.bf16.mxu0 0
  %1160 = vmatpush1.bf16.msra.mxu0 %v1127
  %1161 = vmatprep.subr.bf16.mxu0 0
  %1162 = vmatpush1.bf16.msra.mxu0 %v1128
  %1163 = vmatprep.subr.bf16.mxu0 0
  %1164 = vmatpush1.bf16.msra.mxu0 %v1129
  %1165 = vmatprep.subr.bf16.mxu0 0
  %1166 = vmatpush1.bf16.msra.mxu0 %v1130
  %1167 = vmatprep.subr.bf16.mxu0 0
  %1168 = vmatpush1.bf16.msra.mxu0 %v1131
  %1169 = vmatprep.subr.bf16.mxu0 0
  %1170 = vmatpush1.bf16.msra.mxu0 %v1132
  %1171 = vmatprep.subr.bf16.mxu0 0
  %1172 = vmatpush1.bf16.msra.mxu0 %v1133
  %1173 = vmatprep.subr.bf16.mxu0 0
  %1174 = vmatpush1.bf16.msra.mxu0 %v1134
  %1175 = vmatprep.subr.bf16.mxu0 0
  %1176 = vmatpush1.bf16.msra.mxu0 %v1135
  %1177 = vmatprep.subr.bf16.mxu0 0
  %1178 = vmatpush1.bf16.msra.mxu0 %v1136
  %1179 = vmatprep.subr.bf16.mxu0 0
  %1180 = vmatpush1.bf16.msra.mxu0 0
  %1181 = vmatprep.subr.bf16.mxu0 0
  %1182 = vmatpush1.bf16.msra.mxu0 0
  %1183 = vmatprep.subr.bf16.mxu0 0
  %1184 = vmatpush1.bf16.msra.mxu0 0
  %1185 = vmatprep.subr.bf16.mxu0 0
  %1186 = vmatpush1.bf16.msra.mxu0 0
  %1187 = vmatprep.mubr.bf16.mxu0 %v1150
  %1188 = vmatmul.mubr.bf16.gmra.mrb[0].mxu0 %v1040
  %v1189 = vpop.f32.mrb[0].mxu0
  %v1190 = vadd.f32 %v1075, %v1189
  %v1191 = vpop.f32.mrb[0].mxu0
  %v1192 = vpop.f32.mrb[0].mxu0
  %v1193 = vadd.f32 %v1075, %v1192
  %v1194 = vpop.f32.mrb[0].mxu0
  %1195 = vmatprep.mubr.bf16.mxu0 %v1153
  %1196 = vmatmul.mubr.bf16.gmra.mrb[0].mxu0 %v1042
  %v1197 = vpop.f32.mrb[0].mxu0
  %v1198 = vadd.f32 %v1075, %v1197
  %v1199 = vpop.f32.mrb[0].mxu0
  %v1200 = vpop.f32.mrb[0].mxu0
  %v1201 = vadd.f32 %v1075, %v1200
  %v1202 = vpop.f32.mrb[0].mxu0
  %1203 = vdwg.mxu0
  %v1204 = vmul.f32 %v1190, 0.01
  %v1205 = vmul.f32 %v1193, 0.01
  %v1206 = vmul.f32 %v1198, 0.01
  %v1207 = vmul.f32 %v1201, 0.01
  %v1208 = vmax.f32 %v1190, %v1204
  %v1209 = vmax.f32 %v1193, %v1205
  %v1210 = vmax.f32 %v1198, %v1206
  %v1211 = vmax.f32 %v1201, %v1207
  %v1212 = vadd.f32 %v1208, %v776
  %v1213 = vadd.f32 %v1209, %v777
  %v1214 = vadd.f32 %v1210, %v778
  %v1215 = vadd.f32 %v1211, %v779
  %v1216 = vpack.c.bf16 %v1213, %v1212
  %v1217 = vpack.c.bf16 %v1215, %v1214
  %s1218 = scalar_lea.vmem %s5, 32
  %v1219 = vld [vmem:[%s1218] sm:$0xf]
  %v1220 = vld [vmem:[%s1218 + $0x4] sm:$0xf]
  %v1221 = vld [vmem:[%s1218 + $0x8] sm:$0xf]
  %v1222 = vld [vmem:[%s1218 + $0xc] sm:$0xf]
  %v1223 = vld [vmem:[%s1218 + $0x10] sm:$0xf]
  %v1224 = vld [vmem:[%s1218 + $0x14] sm:$0xf]
  %v1225 = vld [vmem:[%s1218 + $0x18] sm:$0xf]
  %v1226 = vld [vmem:[%s1218 + $0x1c] sm:$0xf]
  %s1227 = scalar_lea.vmem %s4, 16
  %v1228 = vld [vmem:[%s1227] sm:$0xf]
  %v1229 = vld [vmem:[%s1227 + $0x4] sm:$0xf]
  %v1230 = vld [vmem:[%s1227 + $0x8] sm:$0xf]
  %v1231 = vld [vmem:[%s1227 + $0xc] sm:$0xf]
  %v1236 = vunpack.c.l.b16 %v1228
  %v1237 = vunpack.c.l.b16 %v1229
  %v1238 = vunpack.c.l.b16 %v1230
  %v1239 = vunpack.c.l.b16 %v1231
  %v1240 = vpack.c.b16 %v1237, %v1236
  %v1241 = vpack.c.b16 %v1239, %v1238
  %1244 = vmatprep.subr.bf16.mxu0 0
  %1245 = vmatpush1.bf16.msra.mxu0 %v1240
  %1246 = vmatprep.subr.bf16.mxu0 0
  %1247 = vmatpush1.bf16.msra.mxu0 %v1241
  %1248 = vmatprep.subr.bf16.mxu0 0
  %1249 = vmatpush1.bf16.msra.mxu0 0
  %1250 = vmatprep.subr.bf16.mxu0 0
  %1251 = vmatpush1.bf16.msra.mxu0 0
  %1252 = vmatprep.subr.bf16.mxu0 0
  %1253 = vmatpush1.bf16.msra.mxu0 0
  %1254 = vmatprep.subr.bf16.mxu0 0
  %1255 = vmatpush1.bf16.msra.mxu0 0
  %1256 = vmatprep.subr.bf16.mxu0 0
  %1257 = vmatpush1.bf16.msra.mxu0 0
  %1258 = vmatprep.subr.bf16.mxu0 0
  %1259 = vmatpush1.bf16.msra.mxu0 0
  %1260 = vmatprep.subr.bf16.mxu0 0
  %1261 = vmatpush1.bf16.msra.mxu0 0
  %1262 = vmatprep.subr.bf16.mxu0 0
  %1263 = vmatpush1.bf16.msra.mxu0 0
  %1264 = vmatprep.subr.bf16.mxu0 0
  %1265 = vmatpush1.bf16.msra.mxu0 0
  %1266 = vmatprep.subr.bf16.mxu0 0
  %1267 = vmatpush1.bf16.msra.mxu0 0
  %1268 = vmatprep.subr.bf16.mxu0 0
  %1269 = vmatpush1.bf16.msra.mxu0 0
  %1270 = vmatprep.subr.bf16.mxu0 0
  %1271 = vmatpush1.bf16.msra.mxu0 0
  %1272 = vmatprep.subr.bf16.mxu0 0
  %1273 = vmatpush1.bf16.msra.mxu0 0
  %1274 = vmatprep.subr.bf16.mxu0 0
  %1275 = vmatpush1.bf16.msra.mxu0 0
  %1276 = vmatprep.mubr.bf16.mxu0 0
  %1277 = vmatmul.mubr.bf16.gmra.mrb[0].mxu0 %v628
  %v1278 = vpop.f32.mrb[0].mxu0
  %v1279 = vadd.f32 0.0, %v1278
  %v1280 = vpop.f32.mrb[0].mxu0
  %v1281 = vpop.f32.mrb[0].mxu0
  %v1282 = vadd.f32 0.0, %v1281
  %v1283 = vpop.f32.mrb[0].mxu0
  %1284 = vmatprep.mubr.bf16.mxu0 0
  %1285 = vmatmul.mubr.bf16.gmra.mrb[0].mxu0 %v631
  %v1286 = vpop.f32.mrb[0].mxu0
  %v1287 = vadd.f32 0.0, %v1286
  %v1288 = vpop.f32.mrb[0].mxu0
  %v1289 = vpop.f32.mrb[0].mxu0
  %v1290 = vadd.f32 0.0, %v1289
  %v1291 = vpop.f32.mrb[0].mxu0
  %1292 = vdwg.mxu0
  %v1301 = vunpack.c.l.b16 %v1219
  %v1302 = vunpack.c.l.b16 %v1220
  %v1303 = vunpack.c.l.b16 %v1221
  %v1304 = vunpack.c.l.b16 %v1222
  %v1305 = vunpack.c.l.b16 %v1223
  %v1306 = vunpack.c.l.b16 %v1224
  %v1307 = vunpack.c.l.b16 %v1225
  %v1308 = vunpack.c.l.b16 %v1226
  %v1309 = vpack.c.b16 %v1302, %v1301
  %v1310 = vpack.c.b16 %v1304, %v1303
  %v1311 = vpack.c.b16 %v1306, %v1305
  %v1312 = vpack.c.b16 %v1308, %v1307
  %v1318 = vsel %vm205, %v1216, 0
  %v1321 = vsel %vm205, %v1217, 0
  %1323 = vmatprep.subr.bf16.mxu0 0
  %1324 = vmatpush1.bf16.msra.mxu0 %v1309
  %1325 = vmatprep.subr.bf16.mxu0 0
  %1326 = vmatpush1.bf16.msra.mxu0 %v1310
  %1327 = vmatprep.subr.bf16.mxu0 0
  %1328 = vmatpush1.bf16.msra.mxu0 %v1311
  %1329 = vmatprep.subr.bf16.mxu0 0
  %1330 = vmatpush1.bf16.msra.mxu0 %v1312
  %1331 = vmatprep.subr.bf16.mxu0 0
  %1332 = vmatpush1.bf16.msra.mxu0 0
  %1333 = vmatprep.subr.bf16.mxu0 0
  %1334 = vmatpush1.bf16.msra.mxu0 0
  %1335 = vmatprep.subr.bf16.mxu0 0
  %1336 = vmatpush1.bf16.msra.mxu0 0
  %1337 = vmatprep.subr.bf16.mxu0 0
  %1338 = vmatpush1.bf16.msra.mxu0 0
  %1339 = vmatprep.subr.bf16.mxu0 0
  %1340 = vmatpush1.bf16.msra.mxu0 0
  %1341 = vmatprep.subr.bf16.mxu0 0
  %1342 = vmatpush1.bf16.msra.mxu0 0
  %1343 = vmatprep.subr.bf16.mxu0 0
  %1344 = vmatpush1.bf16.msra.mxu0 0
  %1345 = vmatprep.subr.bf16.mxu0 0
  %1346 = vmatpush1.bf16.msra.mxu0 0
  %1347 = vmatprep.subr.bf16.mxu0 0
  %1348 = vmatpush1.bf16.msra.mxu0 0
  %1349 = vmatprep.subr.bf16.mxu0 0
  %1350 = vmatpush1.bf16.msra.mxu0 0
  %1351 = vmatprep.subr.bf16.mxu0 0
  %1352 = vmatpush1.bf16.msra.mxu0 0
  %1353 = vmatprep.subr.bf16.mxu0 0
  %1354 = vmatpush1.bf16.msra.mxu0 0
  %1355 = vmatprep.mubr.bf16.mxu0 0
  %1356 = vmatmul.mubr.bf16.gmra.mrb[0].mxu0 %v1318
  %v1357 = vpop.f32.mrb[0].mxu0
  %v1358 = vadd.f32 %v1279, %v1357
  %v1359 = vpop.f32.mrb[0].mxu0
  %v1360 = vpop.f32.mrb[0].mxu0
  %v1361 = vadd.f32 %v1282, %v1360
  %v1362 = vpop.f32.mrb[0].mxu0
  %1363 = vmatprep.mubr.bf16.mxu0 0
  %1364 = vmatmul.mubr.bf16.gmra.mrb[0].mxu0 %v1321
  %v1365 = vpop.f32.mrb[0].mxu0
  %v1366 = vadd.f32 %v1287, %v1365
  %v1367 = vpop.f32.mrb[0].mxu0
  %v1368 = vpop.f32.mrb[0].mxu0
  %v1369 = vadd.f32 %v1290, %v1368
  %v1370 = vpop.f32.mrb[0].mxu0
  %1371 = vdwg.mxu0
  %s1372 = scalar_lea.vmem %s6, 1
  %v1373 = vld [vmem:[%s1372] sm:$0x1]
  %v1375 = vlaneseq
  %v1376 = vshrl.u32 %v1375, 7
  %v1377 = vsub.s32 0, %v1376
  %v1378 = vrot.slane %v1373, %v1377
  %v1380 = vadd.f32 %v1358, %v1378
  %v1381 = vadd.f32 %v1361, %v1378
  %v1382 = vadd.f32 %v1366, %v1378
  %v1383 = vadd.f32 %v1369, %v1378
  %v1384 = vsel %vm162, %v1212, %v776
  %v1385 = vsel %vm162, %v1213, %v777
  %v1386 = vsel %vm162, %v1214, %v778
  %v1387 = vsel %vm162, %v1215, %v779
  %v1388 = vadd.f32 %v1384, %v1380
  %v1389 = vadd.f32 %v1385, %v1381
  %v1390 = vadd.f32 %v1386, %v1382
  %v1391 = vadd.f32 %v1387, %v1383
  %1392 = vst.msk [vmem:[%s7] sm:$0xff] %vm205, %v1388
  %1393 = vst.msk [vmem:[%s7 + $0x8] sm:$0xff] %vm205, %v1389
  %1394 = vst.msk [vmem:[%s7 + $0x10] sm:$0xff] %vm205, %v1390
  %1395 = vst.msk [vmem:[%s7 + $0x18] sm:$0xff] %vm205, %v1391
  // Predicated region
  $region30: #{_my_decoder_pallas_impl.1} parent=0 // pred_check
    _
  $region31: #{_my_decoder_pallas_impl.1} parent=0 // pred_check_branch
    %1397 = sbr.rel (0) target = $region33
  $region32: #{_my_decoder_pallas_impl.1} parent=0 // pred_region
    _
  $region33: #{_my_decoder_pallas_impl.1} parent=0 // pred_fallthru
    _
  // Predicated region
  $region34: #{_my_decoder_pallas_impl.1} parent=0 // pred_check
    _
  $region35: #{_my_decoder_pallas_impl.1} parent=0 // pred_check_branch
    %1399 = sbr.rel (0) target = $region37
  $region36: #{_my_decoder_pallas_impl.1} parent=0 // pred_region
    _
  $region37: #{_my_decoder_pallas_impl.1} parent=0 // pred_fallthru
    _

</llo_original>
